<compile_context>
chip_gen: v6e
topology: v6e:2x2x1
jax: 0.10.0
libtpu: 0.0.40
codegen_flags: <defaults>
</compile_context>

<pallas_src>
import math
from functools import partial

import jax
import jax.numpy as jnp
from jax.experimental import pallas as pl
from jax.experimental.pallas import tpu as pltpu

# ---------------- small config (consistent with AMPLIFYConfig semantics) -----
B = 2            # batch
S = 8            # seq len
H = 4            # num_attention_heads
DH = 16          # d_head
D = H * DH       # hidden_size = 64
DH2 = DH // 2
INTER_CFG = 128  # config.intermediate_size
# SwiGLU hidden size, same rounding as the torch module
I = 8 * ((int(2 * INTER_CFG / 3) + 8 - 1) // 8)   # 88
IP = 128         # I zero-padded to a full lane tile inside the fused weights
EPS = 1e-5
NEG = -1e9


# ------------------------------ Pallas kernel --------------------------------
def encoder_block_kernel(x_ref, mask_ref, rot_ref, nw_ref,
                         wqkv_ref, wo_ref, w12_ref, w3_ref,
                         y_ref, attw_ref, *, bb):
    MM = bb * S            # matmul rows in this grid step
    N = bb * H             # (batch, head) stacked attention batch dim

    x = x_ref[...].reshape(MM, D)        # (MM, D)
    mask = mask_ref[...]                 # (bb, S, S), additive pad mask
    cosf = rot_ref[0]                    # (S, DH)  = [cos | cos]
    sinf = rot_ref[1]                    # (S, DH)  = [-sin | sin]  (sign folded)
    anw = nw_ref[0]                      # (D,) attention_norm weight
    fnw = nw_ref[1]                      # (D,) ffn_norm weight

    def rmsnorm(v, w):
        ms = jnp.mean(v * v, axis=-1, keepdims=True)
        return v * jax.lax.rsqrt(ms + EPS) * w[None, :]

    def mm(a, b):
        return jnp.dot(a, b, preferred_element_type=jnp.float32)

    # ---- attention block (pre-norm) ----
    xn = rmsnorm(x, anw)
    qkv = mm(xn, wqkv_ref[...])          # (MM, 3D): ONE fused MXU matmul

    def heads(base):
        # Split the per-head 16-lane chunks once and stack them head-major:
        # columns [base, base+D) of qkv  ->  (bb*H, S, DH), batch-major order.
        parts = [qkv[:, base + h * DH: base + (h + 1) * DH].reshape(bb, S, DH)
                 for h in range(H)]
        return jnp.stack(parts, axis=1).reshape(N, S, DH)

    q = heads(0)          # per-head layout [even(8) | odd(8)], 1/sqrt(dh) folded
    k = heads(D)
    v = heads(2 * D)

    # rotary: one full pass over all (batch, head) at once
    def rope(t):
        swapped = jnp.concatenate([t[..., DH2:], t[..., :DH2]], axis=-1)
        return t * cosf[None] + swapped * sinf[None]

    qr = rope(q)
    kr = rope(k)

    # batched scores over all heads + single stacked softmax pass
    s = jnp.einsum('nsd,ntd->nst', qr, kr,
                   preferred_element_type=jnp.float32)            # (N, S, S)
    s = s.reshape(bb, H, S, S) + mask[:, None, :, :]
    m = jnp.max(s, axis=-1, keepdims=True)
    e = jnp.exp(s - m)
    p = e * pl.reciprocal(jnp.sum(e, axis=-1, keepdims=True), approx=True)
    attw_ref[...] = p                                             # single store

    pv = jnp.einsum('nst,ntd->nsd', p.reshape(N, S, S), v,
                    preferred_element_type=jnp.float32)           # (N, S, DH)
    pv = pv.reshape(bb, H, S, DH)

    # output projection: accumulate per head (no lane-concatenate of head outs)
    wo = wo_ref[...]
    attn_out = mm(pv[:, 0].reshape(MM, DH), wo[:DH, :])
    for h in range(1, H):
        attn_out = attn_out + mm(pv[:, h].reshape(MM, DH),
                                 wo[h * DH:(h + 1) * DH, :])

    x1 = x + attn_out                    # residual 1

    # ---- FFN block (pre-norm SwiGLU) ----
    x1n = rmsnorm(x1, fnw)
    h12 = mm(x1n, w12_ref[...])          # (MM, 2*IP): ONE fused w1|w2 matmul
    g = jax.nn.silu(h12[:, :IP]) * h12[:, IP:]   # padded lanes are exact zeros
    ff = mm(g, w3_ref[...])              # (MM, D); padded w3 rows are zeros
    y_ref[...] = (x1 + ff).reshape(bb, S, D)     # residual 2


# ------------------------------ wrapper ---------------------------------------
def _num_tensorcores_per_chip():
    """Best-effort TensorCore count per chip (v4/v5p/v7x megacore -> 2)."""
    try:
        kind = jax.devices()[0].device_kind.lower()
    except Exception:
        return 1
    return 2 if any(t in kind for t in ("v7", "v5p", "v4")) else 1


def encoder_block(x, pad_mask, rot, nw, wqkv, wo, w12, w3p):
    # Single-TC chips (v5e/v6e): collapse the batch into one grid step.
    # Multi-TC chips (v7x): keep grid=(B,) parallel so batch shards across TCs.
    bb = 1 if (_num_tensorcores_per_chip() > 1 and B > 1) else B
    grid = (B // bb,)
    mask3 = pad_mask.reshape(B, S, S)    # drop the broadcast head dim

    const = lambda *shape: pl.BlockSpec(shape, lambda g: (0,) * len(shape))
    return pl.pallas_call(
        partial(encoder_block_kernel, bb=bb),
        out_shape=(jax.ShapeDtypeStruct((B, S, D), jnp.float32),
                   jax.ShapeDtypeStruct((B, H, S, S), jnp.float32)),
        grid=grid,
        in_specs=[
            pl.BlockSpec((bb, S, D), lambda g: (g, 0, 0)),        # x
            pl.BlockSpec((bb, S, S), lambda g: (g, 0, 0)),        # additive mask
            const(2, S, DH),                                      # cos | signed sin
            const(2, D),                                          # attn_norm|ffn_norm
            const(D, 3 * D),                                      # fused Wq|Wk|Wv
            const(D, D),                                          # Wo
            const(D, 2 * IP),                                     # fused W1|W2 (padded)
            const(IP, D),                                         # W3 (padded rows)
        ],
        out_specs=[
            pl.BlockSpec((bb, S, D), lambda g: (g, 0, 0)),        # y
            pl.BlockSpec((bb, H, S, S), lambda g: (g, 0, 0, 0)),  # attn weights
        ],
        compiler_params=pltpu.CompilerParams(
            dimension_semantics=("parallel",)),
    )(x, mask3, rot, nw, wqkv, wo, w12, w3p)


# --------------------------- plain-JAX reference ------------------------------
def reference(x, pad_mask, cos, sin, anw, fnw, wq_t, wk_t, wv_t, wo_t,
              w1_t, w2_t, w3_t):
    def rmsnorm(v, w):
        return v * jax.lax.rsqrt(jnp.mean(v * v, -1, keepdims=True) + EPS) * w

    def rope(t):  # t: (B, S, H, DH), torch-style interleaved pairs
        tp = t.reshape(B, S, H, DH2, 2)
        a, b = tp[..., 0], tp[..., 1]
        c = cos[None, :, None, :]
        s_ = sin[None, :, None, :]
        ra, rb = a * c - b * s_, a * s_ + b * c
        return jnp.stack([ra, rb], axis=-1).reshape(B, S, H, DH)

    xn = rmsnorm(x, anw)
    q = (xn @ wq_t).reshape(B, S, H, DH)
    k = (xn @ wk_t).reshape(B, S, H, DH)
    v = (xn @ wv_t).reshape(B, S, H, DH)
    q, k = rope(q), rope(k)
    scores = jnp.einsum("bshd,bthd->bhst", q, k) / math.sqrt(DH) + pad_mask
    p = jax.nn.softmax(scores, axis=-1)                      # (B, H, S, S)
    attn = jnp.einsum("bhst,bthd->bshd", p, v).reshape(B, S, D)
    x1 = x + attn @ wo_t
    x1n = rmsnorm(x1, fnw)
    ff = (jax.nn.silu(x1n @ w1_t) * (x1n @ w2_t)) @ w3_t
    return x1 + ff, p


# ----------------------------------- main -------------------------------------
if __name__ == "__main__":
    key = jax.random.PRNGKey(0)
    keys = jax.random.split(key, 10)

    x = jax.random.normal(keys[0], (B, S, D), jnp.float32)

    # additive pad mask: last two keys of batch 1 are padding
    valid = jnp.ones((B, S), jnp.float32).at[1, 6:].set(0.0)
    pad_mask = jnp.broadcast_to(
        jnp.where(valid[:, None, None, :] > 0, 0.0, NEG), (B, 1, S, S))

    # rotary tables (LLaMA-style freqs_cis, stored as cos/sin)
    freqs = 1.0 / (10000.0 ** (jnp.arange(0, DH, 2, dtype=jnp.float32) / DH))
    angles = jnp.outer(jnp.arange(S, dtype=jnp.float32), freqs)  # (S, DH2)
    cos, sin = jnp.cos(angles), jnp.sin(angles)

    # deterministic parameter init (torch Linear stores (out,in); we keep the
    # transposed (in,out) layout so the kernel does plain x @ W)
    init = lambda k, shape: (0.02 * jax.random.normal(k, shape)).astype(jnp.float32)
    wq_t = init(keys[1], (D, D))
    wk_t = init(keys[2], (D, D))
    wv_t = init(keys[3], (D, D))
    wo_t = init(keys[4], (D, D))
    w1_t = init(keys[5], (D, I))   # SwiGLU w1
    w2_t = init(keys[6], (D, I))   # SwiGLU w2 (gate)
    w3_t = init(keys[7], (I, D))   # SwiGLU w3 (out proj)
    anw = jnp.ones((1, D), jnp.float32)   # RMSNorm weights
    fnw = jnp.ones((1, D), jnp.float32)

    # ---- host-side packing for the kernel ----
    # de-interleave per-head rotary pairs in the Q/K output columns and fold
    # the 1/sqrt(d_head) attention scale into Wq; fuse Q|K|V into one weight
    perm = []
    for h in range(H):
        perm += [h * DH + 2 * j for j in range(DH2)]
        perm += [h * DH + 2 * j + 1 for j in range(DH2)]
    perm = jnp.asarray(perm, jnp.int32)
    scale = 1.0 / math.sqrt(DH)
    wqkv = jnp.concatenate([wq_t[:, perm] * scale, wk_t[:, perm], wv_t], axis=1)

    # fused + zero-padded SwiGLU weights (I=88 -> IP=128 lanes per half)
    w12 = jnp.concatenate([jnp.pad(w1_t, ((0, 0), (0, IP - I))),
                           jnp.pad(w2_t, ((0, 0), (0, IP - I)))], axis=1)
    w3p = jnp.pad(w3_t, ((0, IP - I), (0, 0)))                   # (IP, D)

    # rotary tables matching the de-interleaved layout, sign folded into sin
    rot = jnp.stack([jnp.concatenate([cos, cos], axis=-1),
                     jnp.concatenate([-sin, sin], axis=-1)], axis=0)  # (2,S,DH)

    nw = jnp.concatenate([anw, fnw], axis=0)                     # (2, D)

    y, attw = encoder_block(x, pad_mask, rot, nw, wqkv, wo_t, w12, w3p)
    y, attw = jax.block_until_ready((y, attw))

    y_ref, attw_ref = reference(x, pad_mask, cos, sin, anw[0], fnw[0],
                                wq_t, wk_t, wv_t, wo_t, w1_t, w2_t, w3_t)
    # tolerance includes slack for the EUP approximate-reciprocal softmax denom
    assert jnp.allclose(y, y_ref, atol=5e-3, rtol=5e-3), "output mismatch"
    assert jnp.allclose(attw, attw_ref, atol=5e-3, rtol=5e-3), "attn mismatch"

    print("KERNEL_OK")
</pallas_src>

<mosaic_0001>
module attributes {stable_mosaic.version = 11 : i64} {
  func.func @encoder_block_kernel(%arg0: i32, %arg1: memref<2x8x64xf32, #tpu.memory_space<vmem>>, %arg2: memref<2x8x8xf32, #tpu.memory_space<vmem>>, %arg3: memref<2x8x16xf32, #tpu.memory_space<vmem>>, %arg4: memref<2x64xf32, #tpu.memory_space<vmem>>, %arg5: memref<64x192xf32, #tpu.memory_space<vmem>>, %arg6: memref<64x64xf32, #tpu.memory_space<vmem>>, %arg7: memref<64x256xf32, #tpu.memory_space<vmem>>, %arg8: memref<128x64xf32, #tpu.memory_space<vmem>>, %arg9: memref<2x8x64xf32, #tpu.memory_space<vmem>>, %arg10: memref<2x4x8x8xf32, #tpu.memory_space<vmem>>) attributes {dimension_semantics = [#tpu.dimension_semantics<parallel>], iteration_bounds = array<i64: 1>, scalar_prefetch = 0 : i64, scratch_operands = 0 : i64, tpu.core_type = #tpu.core_type<tc>, window_params = [{transform_indices = @transform_0, window_bounds = array<i64: 2, 8, 64>}, {transform_indices = @transform_1, window_bounds = array<i64: 2, 8, 8>}, {pipeline_mode = #tpu.pipeline_mode<synchronous>, transform_indices = @transform_2, window_bounds = array<i64: 2, 8, 16>}, {pipeline_mode = #tpu.pipeline_mode<synchronous>, transform_indices = @transform_3, window_bounds = array<i64: 2, 64>}, {pipeline_mode = #tpu.pipeline_mode<synchronous>, transform_indices = @transform_4, window_bounds = array<i64: 64, 192>}, {pipeline_mode = #tpu.pipeline_mode<synchronous>, transform_indices = @transform_5, window_bounds = array<i64: 64, 64>}, {pipeline_mode = #tpu.pipeline_mode<synchronous>, transform_indices = @transform_6, window_bounds = array<i64: 64, 256>}, {pipeline_mode = #tpu.pipeline_mode<synchronous>, transform_indices = @transform_7, window_bounds = array<i64: 128, 64>}, {transform_indices = @transform_8, window_bounds = array<i64: 2, 8, 64>}, {transform_indices = @transform_9, window_bounds = array<i64: 2, 4, 8, 8>}]} {
    %c0 = arith.constant 0 : index
    %c0_0 = arith.constant 0 : index
    %c0_1 = arith.constant 0 : index
    %0 = vector.load %arg1[%c0, %c0_0, %c0_1] : memref<2x8x64xf32, #tpu.memory_space<vmem>>, vector<2x8x64xf32>
    %1 = vector.shape_cast %0 : vector<2x8x64xf32> to vector<16x64xf32>
    %c0_2 = arith.constant 0 : index
    %c0_3 = arith.constant 0 : index
    %c0_4 = arith.constant 0 : index
    %2 = vector.load %arg2[%c0_2, %c0_3, %c0_4] : memref<2x8x8xf32, #tpu.memory_space<vmem>>, vector<2x8x8xf32>
    %c0_5 = arith.constant 0 : index
    %c0_6 = arith.constant 0 : index
    %c0_7 = arith.constant 0 : index
    %3 = vector.load %arg3[%c0_5, %c0_6, %c0_7] : memref<2x8x16xf32, #tpu.memory_space<vmem>>, vector<1x8x16xf32>
    %4 = vector.shape_cast %3 : vector<1x8x16xf32> to vector<8x16xf32>
    %c1 = arith.constant 1 : index
    %c0_8 = arith.constant 0 : index
    %c0_9 = arith.constant 0 : index
    %5 = vector.load %arg3[%c1, %c0_8, %c0_9] : memref<2x8x16xf32, #tpu.memory_space<vmem>>, vector<1x8x16xf32>
    %6 = vector.shape_cast %5 : vector<1x8x16xf32> to vector<8x16xf32>
    %c0_10 = arith.constant 0 : index
    %c0_11 = arith.constant 0 : index
    %7 = vector.load %arg4[%c0_10, %c0_11] : memref<2x64xf32, #tpu.memory_space<vmem>>, vector<1x64xf32>
    %8 = vector.shape_cast %7 : vector<1x64xf32> to vector<64xf32>
    %c1_12 = arith.constant 1 : index
    %c0_13 = arith.constant 0 : index
    %9 = vector.load %arg4[%c1_12, %c0_13] : memref<2x64xf32, #tpu.memory_space<vmem>>, vector<1x64xf32>
    %10 = vector.shape_cast %9 : vector<1x64xf32> to vector<64xf32>
    %11 = arith.mulf %1, %1 : vector<16x64xf32>
    %cst = arith.constant dense<0.000000e+00> : vector<16xf32>
    %12 = vector.multi_reduction <add>, %11, %cst [1] : vector<16x64xf32> to vector<16xf32>
    %13 = vector.shape_cast %12 : vector<16xf32> to vector<16x1xf32>
    %cst_14 = arith.constant 6.400000e+01 : f32
    %14 = vector.broadcast %cst_14 : f32 to vector<16x1xf32>
    %15 = arith.divf %13, %14 : vector<16x1xf32>
    %cst_15 = arith.constant 9.99999974E-6 : f32
    %16 = vector.broadcast %cst_15 : f32 to vector<16x1xf32>
    %17 = arith.addf %15, %16 : vector<16x1xf32>
    %18 = math.rsqrt %17 : vector<16x1xf32>
    %19 = vector.broadcast %18 : vector<16x1xf32> to vector<16x64xf32>
    %20 = arith.mulf %1, %19 : vector<16x64xf32>
    %21 = vector.shape_cast %8 : vector<64xf32> to vector<1x64xf32>
    %22 = vector.broadcast %21 : vector<1x64xf32> to vector<16x64xf32>
    %23 = arith.mulf %20, %22 : vector<16x64xf32>
    %c0_16 = arith.constant 0 : index
    %c0_17 = arith.constant 0 : index
    %24 = vector.load %arg5[%c0_16, %c0_17] : memref<64x192xf32, #tpu.memory_space<vmem>>, vector<64x192xf32>
    %cst_18 = arith.constant dense<0.000000e+00> : vector<16x192xf32>
    %25 = tpu.matmul %23, %24, %cst_18 {dimension_numbers = #tpu.dot_dimension_numbers<[1], [0], [0], [1], [0, 0, 1, 1], [], []>} : vector<16x64xf32>, vector<64x192xf32>, vector<16x192xf32> -> vector<16x192xf32>
    %26 = vector.extract_strided_slice %25 {offsets = [0, 0], sizes = [16, 16], strides = [1, 1]} : vector<16x192xf32> to vector<16x16xf32>
    %27 = vector.shape_cast %26 : vector<16x16xf32> to vector<2x8x16xf32>
    %28 = vector.extract_strided_slice %25 {offsets = [0, 16], sizes = [16, 16], strides = [1, 1]} : vector<16x192xf32> to vector<16x16xf32>
    %29 = vector.shape_cast %28 : vector<16x16xf32> to vector<2x8x16xf32>
    %30 = vector.extract_strided_slice %25 {offsets = [0, 32], sizes = [16, 16], strides = [1, 1]} : vector<16x192xf32> to vector<16x16xf32>
    %31 = vector.shape_cast %30 : vector<16x16xf32> to vector<2x8x16xf32>
    %32 = vector.extract_strided_slice %25 {offsets = [0, 48], sizes = [16, 16], strides = [1, 1]} : vector<16x192xf32> to vector<16x16xf32>
    %33 = vector.shape_cast %32 : vector<16x16xf32> to vector<2x8x16xf32>
    %34 = vector.shape_cast %27 : vector<2x8x16xf32> to vector<2x1x8x16xf32>
    %35 = vector.shape_cast %29 : vector<2x8x16xf32> to vector<2x1x8x16xf32>
    %36 = vector.shape_cast %31 : vector<2x8x16xf32> to vector<2x1x8x16xf32>
    %37 = vector.shape_cast %33 : vector<2x8x16xf32> to vector<2x1x8x16xf32>
    %38 = tpu.concatenate %34, %35, %36, %37 in 1 : vector<2x1x8x16xf32>, vector<2x1x8x16xf32>, vector<2x1x8x16xf32>, vector<2x1x8x16xf32> -> vector<2x4x8x16xf32>
    %39 = vector.shape_cast %38 : vector<2x4x8x16xf32> to vector<8x8x16xf32>
    %40 = vector.extract_strided_slice %25 {offsets = [0, 64], sizes = [16, 16], strides = [1, 1]} : vector<16x192xf32> to vector<16x16xf32>
    %41 = vector.shape_cast %40 : vector<16x16xf32> to vector<2x8x16xf32>
    %42 = vector.extract_strided_slice %25 {offsets = [0, 80], sizes = [16, 16], strides = [1, 1]} : vector<16x192xf32> to vector<16x16xf32>
    %43 = vector.shape_cast %42 : vector<16x16xf32> to vector<2x8x16xf32>
    %44 = vector.extract_strided_slice %25 {offsets = [0, 96], sizes = [16, 16], strides = [1, 1]} : vector<16x192xf32> to vector<16x16xf32>
    %45 = vector.shape_cast %44 : vector<16x16xf32> to vector<2x8x16xf32>
    %46 = vector.extract_strided_slice %25 {offsets = [0, 112], sizes = [16, 16], strides = [1, 1]} : vector<16x192xf32> to vector<16x16xf32>
    %47 = vector.shape_cast %46 : vector<16x16xf32> to vector<2x8x16xf32>
    %48 = vector.shape_cast %41 : vector<2x8x16xf32> to vector<2x1x8x16xf32>
    %49 = vector.shape_cast %43 : vector<2x8x16xf32> to vector<2x1x8x16xf32>
    %50 = vector.shape_cast %45 : vector<2x8x16xf32> to vector<2x1x8x16xf32>
    %51 = vector.shape_cast %47 : vector<2x8x16xf32> to vector<2x1x8x16xf32>
    %52 = tpu.concatenate %48, %49, %50, %51 in 1 : vector<2x1x8x16xf32>, vector<2x1x8x16xf32>, vector<2x1x8x16xf32>, vector<2x1x8x16xf32> -> vector<2x4x8x16xf32>
    %53 = vector.shape_cast %52 : vector<2x4x8x16xf32> to vector<8x8x16xf32>
    %54 = vector.extract_strided_slice %25 {offsets = [0, 128], sizes = [16, 16], strides = [1, 1]} : vector<16x192xf32> to vector<16x16xf32>
    %55 = vector.shape_cast %54 : vector<16x16xf32> to vector<2x8x16xf32>
    %56 = vector.extract_strided_slice %25 {offsets = [0, 144], sizes = [16, 16], strides = [1, 1]} : vector<16x192xf32> to vector<16x16xf32>
    %57 = vector.shape_cast %56 : vector<16x16xf32> to vector<2x8x16xf32>
    %58 = vector.extract_strided_slice %25 {offsets = [0, 160], sizes = [16, 16], strides = [1, 1]} : vector<16x192xf32> to vector<16x16xf32>
    %59 = vector.shape_cast %58 : vector<16x16xf32> to vector<2x8x16xf32>
    %60 = vector.extract_strided_slice %25 {offsets = [0, 176], sizes = [16, 16], strides = [1, 1]} : vector<16x192xf32> to vector<16x16xf32>
    %61 = vector.shape_cast %60 : vector<16x16xf32> to vector<2x8x16xf32>
    %62 = vector.shape_cast %55 : vector<2x8x16xf32> to vector<2x1x8x16xf32>
    %63 = vector.shape_cast %57 : vector<2x8x16xf32> to vector<2x1x8x16xf32>
    %64 = vector.shape_cast %59 : vector<2x8x16xf32> to vector<2x1x8x16xf32>
    %65 = vector.shape_cast %61 : vector<2x8x16xf32> to vector<2x1x8x16xf32>
    %66 = tpu.concatenate %62, %63, %64, %65 in 1 : vector<2x1x8x16xf32>, vector<2x1x8x16xf32>, vector<2x1x8x16xf32>, vector<2x1x8x16xf32> -> vector<2x4x8x16xf32>
    %67 = vector.shape_cast %66 : vector<2x4x8x16xf32> to vector<8x8x16xf32>
    %68 = vector.extract_strided_slice %39 {offsets = [0, 0, 8], sizes = [8, 8, 8], strides = [1, 1, 1]} : vector<8x8x16xf32> to vector<8x8x8xf32>
    %69 = vector.extract_strided_slice %39 {offsets = [0, 0, 0], sizes = [8, 8, 8], strides = [1, 1, 1]} : vector<8x8x16xf32> to vector<8x8x8xf32>
    %70 = tpu.concatenate %68, %69 in 2 : vector<8x8x8xf32>, vector<8x8x8xf32> -> vector<8x8x16xf32>
    %71 = vector.shape_cast %4 : vector<8x16xf32> to vector<1x8x16xf32>
    %72 = vector.broadcast %71 : vector<1x8x16xf32> to vector<8x8x16xf32>
    %73 = arith.mulf %39, %72 : vector<8x8x16xf32>
    %74 = vector.shape_cast %6 : vector<8x16xf32> to vector<1x8x16xf32>
    %75 = vector.broadcast %74 : vector<1x8x16xf32> to vector<8x8x16xf32>
    %76 = arith.mulf %70, %75 : vector<8x8x16xf32>
    %77 = arith.addf %73, %76 : vector<8x8x16xf32>
    %78 = vector.extract_strided_slice %53 {offsets = [0, 0, 8], sizes = [8, 8, 8], strides = [1, 1, 1]} : vector<8x8x16xf32> to vector<8x8x8xf32>
    %79 = vector.extract_strided_slice %53 {offsets = [0, 0, 0], sizes = [8, 8, 8], strides = [1, 1, 1]} : vector<8x8x16xf32> to vector<8x8x8xf32>
    %80 = tpu.concatenate %78, %79 in 2 : vector<8x8x8xf32>, vector<8x8x8xf32> -> vector<8x8x16xf32>
    %81 = vector.shape_cast %4 : vector<8x16xf32> to vector<1x8x16xf32>
    %82 = vector.broadcast %81 : vector<1x8x16xf32> to vector<8x8x16xf32>
    %83 = arith.mulf %53, %82 : vector<8x8x16xf32>
    %84 = vector.shape_cast %6 : vector<8x16xf32> to vector<1x8x16xf32>
    %85 = vector.broadcast %84 : vector<1x8x16xf32> to vector<8x8x16xf32>
    %86 = arith.mulf %80, %85 : vector<8x8x16xf32>
    %87 = arith.addf %83, %86 : vector<8x8x16xf32>
    "tpu.trace_start"() <{level = 10 : i32, message = "nsd,ntd->nst"}> : () -> ()
    %cst_19 = arith.constant dense<0.000000e+00> : vector<8x8x8xf32>
    %88 = tpu.matmul %77, %87, %cst_19 {dimension_numbers = #tpu.dot_dimension_numbers<[2], [2], [1], [1], [0, 0, 0, 1, 1, 1], [0], [0]>} : vector<8x8x16xf32>, vector<8x8x16xf32>, vector<8x8x8xf32> -> vector<8x8x8xf32>
    "tpu.trace_stop"() : () -> ()
    %89 = vector.shape_cast %88 : vector<8x8x8xf32> to vector<2x4x8x8xf32>
    %90 = vector.shape_cast %2 : vector<2x8x8xf32> to vector<2x1x8x8xf32>
    %91 = vector.broadcast %90 : vector<2x1x8x8xf32> to vector<2x4x8x8xf32>
    %92 = arith.addf %89, %91 : vector<2x4x8x8xf32>
    %cst_20 = arith.constant dense<0xFF800000> : vector<2x4x8xf32>
    %93 = vector.multi_reduction <maximumf>, %92, %cst_20 [3] : vector<2x4x8x8xf32> to vector<2x4x8xf32>
    %94 = vector.shape_cast %93 : vector<2x4x8xf32> to vector<2x4x8x1xf32>
    %95 = vector.broadcast %94 : vector<2x4x8x1xf32> to vector<2x4x8x8xf32>
    %96 = arith.subf %92, %95 : vector<2x4x8x8xf32>
    %97 = math.exp %96 : vector<2x4x8x8xf32>
    %cst_21 = arith.constant dense<0.000000e+00> : vector<2x4x8xf32>
    %98 = vector.multi_reduction <add>, %97, %cst_21 [3] : vector<2x4x8x8xf32> to vector<2x4x8xf32>
    %99 = vector.shape_cast %98 : vector<2x4x8xf32> to vector<2x4x8x1xf32>
    %100 = tpu.reciprocal %99 {approx = true} : vector<2x4x8x1xf32> -> vector<2x4x8x1xf32>
    %101 = vector.broadcast %100 : vector<2x4x8x1xf32> to vector<2x4x8x8xf32>
    %102 = arith.mulf %97, %101 : vector<2x4x8x8xf32>
    %c0_22 = arith.constant 0 : index
    %c0_23 = arith.constant 0 : index
    %c0_24 = arith.constant 0 : index
    %c0_25 = arith.constant 0 : index
    %103 = vector.load %arg10[%c0_22, %c0_23, %c0_24, %c0_25] : memref<2x4x8x8xf32, #tpu.memory_space<vmem>>, vector<2x4x8x8xf32>
    tpu.vector_store %arg10[%c0_22, %c0_23, %c0_24, %c0_25], %102 {strides = array<i32>} : memref<2x4x8x8xf32, #tpu.memory_space<vmem>>, vector<2x4x8x8xf32>,
    %104 = vector.shape_cast %102 : vector<2x4x8x8xf32> to vector<8x8x8xf32>
    "tpu.trace_start"() <{level = 10 : i32, message = "nst,ntd->nsd"}> : () -> ()
    %cst_26 = arith.constant dense<0.000000e+00> : vector<8x8x16xf32>
    %105 = tpu.matmul %104, %67, %cst_26 {dimension_numbers = #tpu.dot_dimension_numbers<[2], [1], [1], [2], [0, 0, 0, 1, 1, 2], [0], [0]>} : vector<8x8x8xf32>, vector<8x8x16xf32>, vector<8x8x16xf32> -> vector<8x8x16xf32>
    "tpu.trace_stop"() : () -> ()
    %106 = vector.shape_cast %105 : vector<8x8x16xf32> to vector<2x4x8x16xf32>
    %c0_27 = arith.constant 0 : index
    %c0_28 = arith.constant 0 : index
    %107 = vector.load %arg6[%c0_27, %c0_28] : memref<64x64xf32, #tpu.memory_space<vmem>>, vector<64x64xf32>
    %108 = vector.extract_strided_slice %106 {offsets = [0, 0, 0, 0], sizes = [2, 1, 8, 16], strides = [1, 1, 1, 1]} : vector<2x4x8x16xf32> to vector<2x1x8x16xf32>
    %109 = vector.shape_cast %108 : vector<2x1x8x16xf32> to vector<2x8x16xf32>
    %110 = vector.shape_cast %109 : vector<2x8x16xf32> to vector<16x16xf32>
    %111 = vector.extract_strided_slice %107 {offsets = [0, 0], sizes = [16, 64], strides = [1, 1]} : vector<64x64xf32> to vector<16x64xf32>
    %cst_29 = arith.constant dense<0.000000e+00> : vector<16x64xf32>
    %112 = tpu.matmul %110, %111, %cst_29 {dimension_numbers = #tpu.dot_dimension_numbers<[1], [0], [0], [1], [0, 0, 1, 1], [], []>} : vector<16x16xf32>, vector<16x64xf32>, vector<16x64xf32> -> vector<16x64xf32>
    %113 = vector.extract_strided_slice %106 {offsets = [0, 1, 0, 0], sizes = [2, 1, 8, 16], strides = [1, 1, 1, 1]} : vector<2x4x8x16xf32> to vector<2x1x8x16xf32>
    %114 = vector.shape_cast %113 : vector<2x1x8x16xf32> to vector<2x8x16xf32>
    %115 = vector.shape_cast %114 : vector<2x8x16xf32> to vector<16x16xf32>
    %116 = vector.extract_strided_slice %107 {offsets = [16, 0], sizes = [16, 64], strides = [1, 1]} : vector<64x64xf32> to vector<16x64xf32>
    %cst_30 = arith.constant dense<0.000000e+00> : vector<16x64xf32>
    %117 = tpu.matmul %115, %116, %cst_30 {dimension_numbers = #tpu.dot_dimension_numbers<[1], [0], [0], [1], [0, 0, 1, 1], [], []>} : vector<16x16xf32>, vector<16x64xf32>, vector<16x64xf32> -> vector<16x64xf32>
    %118 = arith.addf %112, %117 : vector<16x64xf32>
    %119 = vector.extract_strided_slice %106 {offsets = [0, 2, 0, 0], sizes = [2, 1, 8, 16], strides = [1, 1, 1, 1]} : vector<2x4x8x16xf32> to vector<2x1x8x16xf32>
    %120 = vector.shape_cast %119 : vector<2x1x8x16xf32> to vector<2x8x16xf32>
    %121 = vector.shape_cast %120 : vector<2x8x16xf32> to vector<16x16xf32>
    %122 = vector.extract_strided_slice %107 {offsets = [32, 0], sizes = [16, 64], strides = [1, 1]} : vector<64x64xf32> to vector<16x64xf32>
    %cst_31 = arith.constant dense<0.000000e+00> : vector<16x64xf32>
    %123 = tpu.matmul %121, %122, %cst_31 {dimension_numbers = #tpu.dot_dimension_numbers<[1], [0], [0], [1], [0, 0, 1, 1], [], []>} : vector<16x16xf32>, vector<16x64xf32>, vector<16x64xf32> -> vector<16x64xf32>
    %124 = arith.addf %118, %123 : vector<16x64xf32>
    %125 = vector.extract_strided_slice %106 {offsets = [0, 3, 0, 0], sizes = [2, 1, 8, 16], strides = [1, 1, 1, 1]} : vector<2x4x8x16xf32> to vector<2x1x8x16xf32>
    %126 = vector.shape_cast %125 : vector<2x1x8x16xf32> to vector<2x8x16xf32>
    %127 = vector.shape_cast %126 : vector<2x8x16xf32> to vector<16x16xf32>
    %128 = vector.extract_strided_slice %107 {offsets = [48, 0], sizes = [16, 64], strides = [1, 1]} : vector<64x64xf32> to vector<16x64xf32>
    %cst_32 = arith.constant dense<0.000000e+00> : vector<16x64xf32>
    %129 = tpu.matmul %127, %128, %cst_32 {dimension_numbers = #tpu.dot_dimension_numbers<[1], [0], [0], [1], [0, 0, 1, 1], [], []>} : vector<16x16xf32>, vector<16x64xf32>, vector<16x64xf32> -> vector<16x64xf32>
    %130 = arith.addf %124, %129 : vector<16x64xf32>
    %131 = arith.addf %1, %130 : vector<16x64xf32>
    %132 = arith.mulf %131, %131 : vector<16x64xf32>
    %cst_33 = arith.constant dense<0.000000e+00> : vector<16xf32>
    %133 = vector.multi_reduction <add>, %132, %cst_33 [1] : vector<16x64xf32> to vector<16xf32>
    %134 = vector.shape_cast %133 : vector<16xf32> to vector<16x1xf32>
    %cst_34 = arith.constant 6.400000e+01 : f32
    %135 = vector.broadcast %cst_34 : f32 to vector<16x1xf32>
    %136 = arith.divf %134, %135 : vector<16x1xf32>
    %cst_35 = arith.constant 9.99999974E-6 : f32
    %137 = vector.broadcast %cst_35 : f32 to vector<16x1xf32>
    %138 = arith.addf %136, %137 : vector<16x1xf32>
    %139 = math.rsqrt %138 : vector<16x1xf32>
    %140 = vector.broadcast %139 : vector<16x1xf32> to vector<16x64xf32>
    %141 = arith.mulf %131, %140 : vector<16x64xf32>
    %142 = vector.shape_cast %10 : vector<64xf32> to vector<1x64xf32>
    %143 = vector.broadcast %142 : vector<1x64xf32> to vector<16x64xf32>
    %144 = arith.mulf %141, %143 : vector<16x64xf32>
    %c0_36 = arith.constant 0 : index
    %c0_37 = arith.constant 0 : index
    %145 = vector.load %arg7[%c0_36, %c0_37] : memref<64x256xf32, #tpu.memory_space<vmem>>, vector<64x256xf32>
    %cst_38 = arith.constant dense<0.000000e+00> : vector<16x256xf32>
    %146 = tpu.matmul %144, %145, %cst_38 {dimension_numbers = #tpu.dot_dimension_numbers<[1], [0], [0], [1], [0, 0, 1, 1], [], []>} : vector<16x64xf32>, vector<64x256xf32>, vector<16x256xf32> -> vector<16x256xf32>
    %147 = vector.extract_strided_slice %146 {offsets = [0, 0], sizes = [16, 128], strides = [1, 1]} : vector<16x256xf32> to vector<16x128xf32>
    %148 = arith.negf %147 : vector<16x128xf32>
    %149 = math.exp %148 : vector<16x128xf32>
    %cst_39 = arith.constant 1.000000e+00 : f32
    %150 = vector.broadcast %cst_39 : f32 to vector<16x128xf32>
    %151 = arith.addf %150, %149 : vector<16x128xf32>
    %152 = arith.divf %150, %151 : vector<16x128xf32>
    %153 = arith.mulf %147, %152 : vector<16x128xf32>
    %154 = vector.extract_strided_slice %146 {offsets = [0, 128], sizes = [16, 128], strides = [1, 1]} : vector<16x256xf32> to vector<16x128xf32>
    %155 = arith.mulf %153, %154 : vector<16x128xf32>
    %c0_40 = arith.constant 0 : index
    %c0_41 = arith.constant 0 : index
    %156 = vector.load %arg8[%c0_40, %c0_41] : memref<128x64xf32, #tpu.memory_space<vmem>>, vector<128x64xf32>
    %cst_42 = arith.constant dense<0.000000e+00> : vector<16x64xf32>
    %157 = tpu.matmul %155, %156, %cst_42 {dimension_numbers = #tpu.dot_dimension_numbers<[1], [0], [0], [1], [0, 0, 1, 1], [], []>} : vector<16x128xf32>, vector<128x64xf32>, vector<16x64xf32> -> vector<16x64xf32>
    %158 = arith.addf %131, %157 : vector<16x64xf32>
    %159 = vector.shape_cast %158 : vector<16x64xf32> to vector<2x8x64xf32>
    %c0_43 = arith.constant 0 : index
    %c0_44 = arith.constant 0 : index
    %c0_45 = arith.constant 0 : index
    %160 = vector.load %arg9[%c0_43, %c0_44, %c0_45] : memref<2x8x64xf32, #tpu.memory_space<vmem>>, vector<2x8x64xf32>
    tpu.vector_store %arg9[%c0_43, %c0_44, %c0_45], %159 {strides = array<i32>} : memref<2x8x64xf32, #tpu.memory_space<vmem>>, vector<2x8x64xf32>,
    return
  }
  func.func @transform_0(%arg0: i32) -> (i32, i32, i32) {
    %c0_i32 = arith.constant 0 : i32
    %c0_i32_0 = arith.constant 0 : i32
    %c0_i32_1 = arith.constant 0 : i32
    return %arg0, %c0_i32, %c0_i32_0 : i32, i32, i32
  }
  func.func @transform_1(%arg0: i32) -> (i32, i32, i32) {
    %c0_i32 = arith.constant 0 : i32
    %c0_i32_0 = arith.constant 0 : i32
    %c0_i32_1 = arith.constant 0 : i32
    return %arg0, %c0_i32, %c0_i32_0 : i32, i32, i32
  }
  func.func @transform_2(%arg0: i32) -> (i32, i32, i32) {
    %c0_i32 = arith.constant 0 : i32
    %c0_i32_0 = arith.constant 0 : i32
    %c0_i32_1 = arith.constant 0 : i32
    %c0_i32_2 = arith.constant 0 : i32
    return %c0_i32, %c0_i32_0, %c0_i32_1 : i32, i32, i32
  }
  func.func @transform_3(%arg0: i32) -> (i32, i32) {
    %c0_i32 = arith.constant 0 : i32
    %c0_i32_0 = arith.constant 0 : i32
    %c0_i32_1 = arith.constant 0 : i32
    return %c0_i32, %c0_i32_0 : i32, i32
  }
  func.func @transform_4(%arg0: i32) -> (i32, i32) {
    %c0_i32 = arith.constant 0 : i32
    %c0_i32_0 = arith.constant 0 : i32
    %c0_i32_1 = arith.constant 0 : i32
    return %c0_i32, %c0_i32_0 : i32, i32
  }
  func.func @transform_5(%arg0: i32) -> (i32, i32) {
    %c0_i32 = arith.constant 0 : i32
    %c0_i32_0 = arith.constant 0 : i32
    %c0_i32_1 = arith.constant 0 : i32
    return %c0_i32, %c0_i32_0 : i32, i32
  }
  func.func @transform_6(%arg0: i32) -> (i32, i32) {
    %c0_i32 = arith.constant 0 : i32
    %c0_i32_0 = arith.constant 0 : i32
    %c0_i32_1 = arith.constant 0 : i32
    return %c0_i32, %c0_i32_0 : i32, i32
  }
  func.func @transform_7(%arg0: i32) -> (i32, i32) {
    %c0_i32 = arith.constant 0 : i32
    %c0_i32_0 = arith.constant 0 : i32
    %c0_i32_1 = arith.constant 0 : i32
    return %c0_i32, %c0_i32_0 : i32, i32
  }
  func.func @transform_8(%arg0: i32) -> (i32, i32, i32) {
    %c0_i32 = arith.constant 0 : i32
    %c0_i32_0 = arith.constant 0 : i32
    %c0_i32_1 = arith.constant 0 : i32
    return %arg0, %c0_i32, %c0_i32_0 : i32, i32, i32
  }
  func.func @transform_9(%arg0: i32) -> (i32, i32, i32, i32) {
    %c0_i32 = arith.constant 0 : i32
    %c0_i32_0 = arith.constant 0 : i32
    %c0_i32_1 = arith.constant 0 : i32
    %c0_i32_2 = arith.constant 0 : i32
    return %arg0, %c0_i32, %c0_i32_0, %c0_i32_1 : i32, i32, i32, i32
  }
}

</mosaic_0001>

<llo_original>
// kernel: tpu_custom_call.1
$region0: #{tpu_custom_call.1}
  #allocation0 [shape = 'u32[]', space=smem, size = 0x4, offset = 0x4, fixed_abs, tag = 'smem constant byte address 0x4 - core index']
  #allocation1 [shape = 'u32[144,128]{1,0:T(1,128)}', space=vmem, size = 0x12000, scoped, tag = 'internal scratch']
  %s0 = inlined_call_operand.hbm [shape: f32[2,8,64], index: 0, kind: input, shape index: {}]
  %s1 = inlined_call_operand.hbm [shape: f32[2,8,8], index: 1, kind: input, shape index: {}]
  %s2 = inlined_call_operand.hbm [shape: f32[2,8,16], index: 2, kind: input, shape index: {}]
  %s3 = inlined_call_operand.vmem [shape: f32[2,64], index: 3, kind: input, shape index: {}]
  %s4 = inlined_call_operand.vmem [shape: f32[64,192], index: 4, kind: input, shape index: {}]
  %s5 = inlined_call_operand.vmem [shape: f32[64,64], index: 5, kind: input, shape index: {}]
  %s6 = inlined_call_operand.hbm [shape: f32[64,256], index: 6, kind: input, shape index: {}]
  %s7 = inlined_call_operand.vmem [shape: f32[128,64], index: 7, kind: input, shape index: {}]
  %s8 = inlined_call_operand.hbm [shape: f32[2,8,64], index: 8, kind: output, shape index: {0}]
  %s9 = inlined_call_operand.hbm [shape: f32[2,4,8,8], index: 9, kind: output, shape index: {1}]
  %10 = xla_tuple %s8, %s9
  %s11 = sld [smem:[#allocation0]]
  $region66: #{tpu_custom_call.1} parent=0
    _
  %s13 = ssub.s32 1, %s11
  %s14 = scalar_select 0, %s13, %s11
  $region1: #{tpu_custom_call.1} parent=0
    #allocation2 [shape = 'u8[8192]{0}', space=vmem, size = 0x2000, scoped, tag = 'input window, operand 0, single buffered']
    #allocation3 [shape = 's32[1]{0}', space=sflag, size = 0x4, scoped, tag = 'scoped memory for tpu_custom_call.1']
    #allocation4 [shape = 's32[1]{0}', space=sflag, size = 0x4, scoped, tag = 'scoped memory for tpu_custom_call.1']
    #allocation5 [shape = 'u8[8192]{0}', space=vmem, size = 0x2000, scoped, tag = 'input window, operand 1, single buffered']
    #allocation6 [shape = 's32[1]{0}', space=sflag, size = 0x4, scoped, tag = 'scoped memory for tpu_custom_call.1']
    #allocation7 [shape = 'u8[8192]{0}', space=vmem, size = 0x2000, scoped, tag = 'input window, operand 2, single buffered']
    #allocation8 [shape = 'u8[65536]{0}', space=vmem, size = 0x10000, scoped, tag = 'input window, operand 6, single buffered']
    #allocation9 [shape = 's32[1]{0}', space=sflag, size = 0x4, scoped, tag = 'scoped memory for tpu_custom_call.1']
    #allocation10 [shape = 'u8[8192]{0}', space=vmem, size = 0x2000, scoped, tag = 'output window, operand 0, single buffered']
    #allocation11 [shape = 'u8[32768]{0}', space=vmem, size = 0x8000, scoped, tag = 'output window, operand 1, single buffered']
    #allocation12 [shape = 's32[1]{0}', space=sflag, size = 0x4, scoped, tag = 'scoped memory for tpu_custom_call.1']
    %15 = vsyncpa [#allocation3], 0
    %16 = vsyncpa [#allocation6], 0
    %17 = vsyncpa [#allocation9], 0
    %18 = vsyncpa [#allocation4], 0
    %19 = vsyncpa [#allocation12], 0
    // Predicated region
    $region2: #{tpu_custom_call.1} parent=1 // pred_check
      _
    $region3: #{tpu_custom_call.1} parent=1 // pred_check_branch
      %21 = sbr.rel (0) target = $region5
    $region4: #{tpu_custom_call.1} parent=1 // pred_region
      %s23 = ssub.s32 256, 256
      %24 = vsyncadd [#allocation3], %s23
      %s25 = sshll.u32 [#allocation2], 4
      %s26 = int_to_ptr.vmem [resolvable:$true] %s25
      %31 = dma.hbm_to_vmem [thread:$0]  %s0, 256, %s26, [#allocation3], 128, 128, 8
    $region5: #{tpu_custom_call.1} parent=1 // pred_fallthru
      _
    // Predicated region
    $region6: #{tpu_custom_call.1} parent=1 // pred_check
      _
    $region7: #{tpu_custom_call.1} parent=1 // pred_check_branch
      %33 = sbr.rel (0) target = $region9
    $region8: #{tpu_custom_call.1} parent=1 // pred_region
      %s35 = ssub.s32 256, 256
      %36 = vsyncadd [#allocation6], %s35
      %s37 = sshll.u32 [#allocation5], 4
      %s38 = int_to_ptr.vmem [resolvable:$true] %s37
      %43 = dma.hbm_to_vmem [thread:$0]  %s1, 256, %s38, [#allocation6], 128, 128, 8
    $region9: #{tpu_custom_call.1} parent=1 // pred_fallthru
      _
    // Predicated region
    $region10: #{tpu_custom_call.1} parent=1 // pred_check
      _
    $region11: #{tpu_custom_call.1} parent=1 // pred_check_branch
      %45 = sbr.rel (0) target = $region13
    $region12: #{tpu_custom_call.1} parent=1 // pred_region
      %s47 = ssub.s32 256, 256
      %48 = vsyncadd [#allocation6], %s47
      %s49 = sshll.u32 [#allocation7], 4
      %s50 = int_to_ptr.vmem [resolvable:$true] %s49
      %55 = dma.hbm_to_vmem [thread:$0]  %s2, 256, %s50, [#allocation6], 128, 128, 8
    $region13: #{tpu_custom_call.1} parent=1 // pred_fallthru
      _
    // Predicated region
    $region14: #{tpu_custom_call.1} parent=1 // pred_check
      _
    $region15: #{tpu_custom_call.1} parent=1 // pred_check_branch
      %57 = sbr.rel (0) target = $region17
    $region16: #{tpu_custom_call.1} parent=1 // pred_region
      _
    $region17: #{tpu_custom_call.1} parent=1 // pred_fallthru
      _
    // Predicated region
    $region18: #{tpu_custom_call.1} parent=1 // pred_check
      _
    $region19: #{tpu_custom_call.1} parent=1 // pred_check_branch
      %59 = sbr.rel (0) target = $region21
    $region20: #{tpu_custom_call.1} parent=1 // pred_region
      _
    $region21: #{tpu_custom_call.1} parent=1 // pred_fallthru
      _
    // Predicated region
    $region22: #{tpu_custom_call.1} parent=1 // pred_check
      _
    $region23: #{tpu_custom_call.1} parent=1 // pred_check_branch
      %61 = sbr.rel (0) target = $region25
    $region24: #{tpu_custom_call.1} parent=1 // pred_region
      _
    $region25: #{tpu_custom_call.1} parent=1 // pred_fallthru
      _
    // Predicated region
    $region26: #{tpu_custom_call.1} parent=1 // pred_check
      _
    $region27: #{tpu_custom_call.1} parent=1 // pred_check_branch
      %63 = sbr.rel (0) target = $region29
    $region28: #{tpu_custom_call.1} parent=1 // pred_region
      %s65 = ssub.s32 2048, 2048
      %66 = vsyncadd [#allocation9], %s65
      %s67 = sshll.u32 [#allocation8], 4
      %s68 = int_to_ptr.vmem [resolvable:$true] %s67
      %73 = dma.hbm_to_vmem [thread:$0]  %s6, 2048, %s68, [#allocation9], 256, 256, 16
    $region29: #{tpu_custom_call.1} parent=1 // pred_fallthru
      _
    // Predicated region
    $region30: #{tpu_custom_call.1} parent=1 // pred_check
      _
    $region31: #{tpu_custom_call.1} parent=1 // pred_check_branch
      %75 = sbr.rel (0) target = $region33
    $region32: #{tpu_custom_call.1} parent=1 // pred_region
      _
    $region33: #{tpu_custom_call.1} parent=1 // pred_fallthru
      _
    // Predicated region
    $region34: #{tpu_custom_call.1} parent=1 // pred_check
      _
    $region35: #{tpu_custom_call.1} parent=1 // pred_check_branch
      %77 = sbr.rel (0) target = $region37
    $region36: #{tpu_custom_call.1} parent=1 // pred_region
      %78 = dma.done [#allocation3], 256
    $region37: #{tpu_custom_call.1} parent=1 // pred_fallthru
      _
    // Predicated region
    $region38: #{tpu_custom_call.1} parent=1 // pred_check
      _
    $region39: #{tpu_custom_call.1} parent=1 // pred_check_branch
      %80 = sbr.rel (0) target = $region41
    $region40: #{tpu_custom_call.1} parent=1 // pred_region
      %81 = dma.done [#allocation6], 256
    $region41: #{tpu_custom_call.1} parent=1 // pred_fallthru
      _
    // Predicated region
    $region42: #{tpu_custom_call.1} parent=1 // pred_check
      _
    $region43: #{tpu_custom_call.1} parent=1 // pred_check_branch
      %83 = sbr.rel (0) target = $region45
    $region44: #{tpu_custom_call.1} parent=1 // pred_region
      %84 = dma.done [#allocation6], 256
    $region45: #{tpu_custom_call.1} parent=1 // pred_fallthru
      _
    // Predicated region
    $region46: #{tpu_custom_call.1} parent=1 // pred_check
      _
    $region47: #{tpu_custom_call.1} parent=1 // pred_check_branch
      %86 = sbr.rel (0) target = $region49
    $region48: #{tpu_custom_call.1} parent=1 // pred_region
      %87 = dma.done [#allocation9], 2048
    $region49: #{tpu_custom_call.1} parent=1 // pred_fallthru
      _
    %v88 = vld [vmem:[#allocation2] sm:$0xff]
    %v89 = vld [vmem:[#allocation2 + $0x8] sm:$0xff]
    %v90 = vld [vmem:[#allocation5] sm:$0xff]
    %v91 = vld [vmem:[#allocation5 + $0x8] sm:$0xff]
    %v92 = vld [vmem:[#allocation7] sm:$0xff]
    %s93 = scalar_lea.vmem [#allocation7], 8
    %v94 = vld [vmem:[%s93] sm:$0xff]
    %v95 = vld [vmem:[%s3] sm:$0x1]
    %v96 = vld [vmem:[%s3 + $0x1] sm:$0x1]
    %v97 = vmul.f32 %v88, %v88
    %v98 = vmul.f32 %v89, %v89
    %vm99 = vcmask 523264
    %v100 = vsel %vm99, %v97, 0.0
    %101 = vadd.xlane.f32.xlu0 %v100
    %v102 = vpop.xlane.xlu0 %101
    %v103 = vsel %vm99, %v98, 0.0
    %104 = vadd.xlane.f32.xlu0 %v103
    %v105 = vpop.xlane.xlu0 %104
    %v106 = vrcp.pop 64.0
    %v107 = vmul.f32 %v102, %v106
    %v108 = vmul.f32 %v105, %v106
    %v109 = vadd.f32 %v107, 1e-05
    %v110 = vadd.f32 %v108, 1e-05
    %v111 = vrsqrt.pop %v109
    %v112 = vrsqrt.pop %v110
    %v113 = vmul.f32 %v88, %v111
    %v114 = vmul.f32 %v89, %v112
    %v115 = vlaneseq
    %v116 = vshrl.u32 %v115, 7
    %v117 = vsub.s32 0, %v116
    %v118 = vrot.slane %v95, %v117
    %v119 = vmul.f32 %v113, %v118
    %v120 = vmul.f32 %v114, %v118
    %v121 = vld [vmem:[%s4] sm:$0xff]
    %v122 = vld [vmem:[%s4 + $0x8] sm:$0xff]
    %v123 = vld [vmem:[%s4 + $0x10] sm:$0xff]
    %v124 = vld [vmem:[%s4 + $0x18] sm:$0xff]
    %v125 = vld [vmem:[%s4 + $0x20] sm:$0xff]
    %v126 = vld [vmem:[%s4 + $0x28] sm:$0xff]
    %v127 = vld [vmem:[%s4 + $0x30] sm:$0xff]
    %v128 = vld [vmem:[%s4 + $0x38] sm:$0xff]
    %v129 = vld [vmem:[%s4 + $0x40] sm:$0xff]
    %v130 = vld [vmem:[%s4 + $0x48] sm:$0xff]
    %v131 = vld [vmem:[%s4 + $0x50] sm:$0xff]
    %v132 = vld [vmem:[%s4 + $0x58] sm:$0xff]
    %v133 = vld [vmem:[%s4 + $0x60] sm:$0xff]
    %v134 = vld [vmem:[%s4 + $0x68] sm:$0xff]
    %v135 = vld [vmem:[%s4 + $0x70] sm:$0xff]
    %v136 = vld [vmem:[%s4 + $0x78] sm:$0xff]
    %v138 = vsel %vm99, %v119, 0
    %v141 = vsel %vm99, %v120, 0
    %143 = vmatprep.subr.mxu0 0.0
    %144 = vmatpush1.msra.mxu0 0.0
    %145 = vmatprep.subr.mxu0 0.0
    %146 = vmatpush1.msra.mxu0 0.0
    %147 = vmatprep.subr.mxu0 0.0
    %148 = vmatpush1.msra.mxu0 0.0
    %149 = vmatprep.subr.mxu0 0.0
    %150 = vmatpush1.msra.mxu0 0.0
    %151 = vmatprep.subr.mxu0 0.0
    %152 = vmatpush1.msra.mxu0 0.0
    %153 = vmatprep.subr.mxu0 0.0
    %154 = vmatpush1.msra.mxu0 0.0
    %155 = vmatprep.subr.mxu0 0.0
    %156 = vmatpush1.msra.mxu0 0.0
    %157 = vmatprep.subr.mxu0 0.0
    %158 = vmatpush1.msra.mxu0 0.0
    %159 = vmatprep.subr.mxu0 %v136
    %160 = vmatpush1.msra.mxu0 %v135
    %161 = vmatprep.subr.mxu0 %v134
    %162 = vmatpush1.msra.mxu0 %v133
    %163 = vmatprep.subr.mxu0 %v132
    %164 = vmatpush1.msra.mxu0 %v131
    %165 = vmatprep.subr.mxu0 %v130
    %166 = vmatpush1.msra.mxu0 %v129
    %167 = vmatprep.subr.mxu0 %v128
    %168 = vmatpush1.msra.mxu0 %v127
    %169 = vmatprep.subr.mxu0 %v126
    %170 = vmatpush1.msra.mxu0 %v125
    %171 = vmatprep.subr.mxu0 %v124
    %172 = vmatpush1.msra.mxu0 %v123
    %173 = vmatprep.subr.mxu0 %v122
    %174 = vmatpush1.msra.mxu0 %v121
    %175 = vmatprep.subr.mxu0 0.0
    %176 = vmatpush2.msra.mxu0 0.0
    %177 = vmatprep.subr.mxu0 0.0
    %178 = vmatpush2.msra.mxu0 0.0
    %179 = vmatprep.subr.mxu0 0.0
    %180 = vmatpush2.msra.mxu0 0.0
    %181 = vmatprep.subr.mxu0 0.0
    %182 = vmatpush2.msra.mxu0 0.0
    %183 = vmatprep.subr.mxu0 0.0
    %184 = vmatpush2.msra.mxu0 0.0
    %185 = vmatprep.subr.mxu0 0.0
    %186 = vmatpush2.msra.mxu0 0.0
    %187 = vmatprep.subr.mxu0 0.0
    %188 = vmatpush2.msra.mxu0 0.0
    %189 = vmatprep.subr.mxu0 0.0
    %190 = vmatpush2.msra.mxu0 0.0
    %191 = vmatprep.subr.mxu0 0.0
    %192 = vmatpush2.msra.mxu0 0.0
    %193 = vmatprep.subr.mxu0 0.0
    %194 = vmatpush2.msra.mxu0 0.0
    %195 = vmatprep.subr.mxu0 0.0
    %196 = vmatpush2.msra.mxu0 0.0
    %197 = vmatprep.subr.mxu0 0.0
    %198 = vmatpush2.msra.mxu0 0.0
    %199 = vmatprep.subr.mxu0 0.0
    %200 = vmatpush2.msra.mxu0 0.0
    %201 = vmatprep.subr.mxu0 0.0
    %202 = vmatpush2.msra.mxu0 0.0
    %203 = vmatprep.subr.mxu0 0.0
    %204 = vmatpush2.msra.mxu0 0.0
    %205 = vmatprep.subr.mxu0 0.0
    %206 = vmatpush2.msra.mxu0 0.0
    %207 = vmatprep.mubr.f32.mxu0 0.0
    %208 = vmatmul.mubr.f32.gmra.mxu0 %v138
    %v209 = vpop.f32.mrf.mxu0
    %v210 = vadd.f32 0.0, %v209
    %v211 = vpop.f32.mrf.mxu0
    %v212 = vadd.f32 0.0, %v211
    %213 = vmatprep.mubr.f32.mxu0 0.0
    %214 = vmatmul.mubr.f32.gmra.mxu0 %v141
    %v215 = vpop.f32.mrf.mxu0
    %v216 = vadd.f32 0.0, %v215
    %v217 = vpop.f32.mrf.mxu0
    %v218 = vadd.f32 0.0, %v217
    %219 = vdwg.mxu0
    %222 = vrot.lane.b32.xlu0 %v210, 112
    %v223 = vpop.permute.xlu0 %222
    %224 = vrot.lane.b32.xlu0 %v216, 112
    %v225 = vpop.permute.xlu0 %224
    %228 = vrot.lane.b32.xlu0 %v210, 96
    %v229 = vpop.permute.xlu0 %228
    %230 = vrot.lane.b32.xlu0 %v216, 96
    %v231 = vpop.permute.xlu0 %230
    %234 = vrot.lane.b32.xlu0 %v210, 80
    %v235 = vpop.permute.xlu0 %234
    %236 = vrot.lane.b32.xlu0 %v216, 80
    %v237 = vpop.permute.xlu0 %236
    %242 = vrot.lane.b32.xlu0 %v212, 112
    %v243 = vpop.permute.xlu0 %242
    %244 = vrot.lane.b32.xlu0 %v218, 112
    %v245 = vpop.permute.xlu0 %244
    %248 = vrot.lane.b32.xlu0 %v212, 96
    %v249 = vpop.permute.xlu0 %248
    %250 = vrot.lane.b32.xlu0 %v218, 96
    %v251 = vpop.permute.xlu0 %250
    %254 = vrot.lane.b32.xlu0 %v212, 80
    %v255 = vpop.permute.xlu0 %254
    %256 = vrot.lane.b32.xlu0 %v218, 80
    %v257 = vpop.permute.xlu0 %256
    %260 = vrot.lane.b32.xlu0 %v210, 120
    %v261 = vpop.permute.xlu0 %260
    %262 = vrot.lane.b32.xlu0 %v223, 120
    %v263 = vpop.permute.xlu0 %262
    %264 = vrot.lane.b32.xlu0 %v229, 120
    %v265 = vpop.permute.xlu0 %264
    %266 = vrot.lane.b32.xlu0 %v235, 120
    %v267 = vpop.permute.xlu0 %266
    %268 = vrot.lane.b32.xlu0 %v216, 120
    %v269 = vpop.permute.xlu0 %268
    %270 = vrot.lane.b32.xlu0 %v225, 120
    %v271 = vpop.permute.xlu0 %270
    %272 = vrot.lane.b32.xlu0 %v231, 120
    %v273 = vpop.permute.xlu0 %272
    %274 = vrot.lane.b32.xlu0 %v237, 120
    %v275 = vpop.permute.xlu0 %274
    %284 = vrot.lane.b32.xlu0 %v210, 8
    %v285 = vpop.permute.xlu0 %284
    %286 = vrot.lane.b32.xlu0 %v223, 8
    %v287 = vpop.permute.xlu0 %286
    %288 = vrot.lane.b32.xlu0 %v229, 8
    %v289 = vpop.permute.xlu0 %288
    %290 = vrot.lane.b32.xlu0 %v235, 8
    %v291 = vpop.permute.xlu0 %290
    %292 = vrot.lane.b32.xlu0 %v216, 8
    %v293 = vpop.permute.xlu0 %292
    %294 = vrot.lane.b32.xlu0 %v225, 8
    %v295 = vpop.permute.xlu0 %294
    %296 = vrot.lane.b32.xlu0 %v231, 8
    %v297 = vpop.permute.xlu0 %296
    %298 = vrot.lane.b32.xlu0 %v237, 8
    %v299 = vpop.permute.xlu0 %298
    %vm308 = vcmask 64512
    %v309 = vsel %vm308, %v261, %v285
    %v310 = vsel %vm308, %v263, %v287
    %v311 = vsel %vm308, %v265, %v289
    %v312 = vsel %vm308, %v267, %v291
    %v313 = vsel %vm308, %v269, %v293
    %v314 = vsel %vm308, %v271, %v295
    %v315 = vsel %vm308, %v273, %v297
    %v316 = vsel %vm308, %v275, %v299
    %v317 = vmul.f32 %v210, %v92
    %v318 = vmul.f32 %v223, %v92
    %v319 = vmul.f32 %v229, %v92
    %v320 = vmul.f32 %v235, %v92
    %v321 = vmul.f32 %v216, %v92
    %v322 = vmul.f32 %v225, %v92
    %v323 = vmul.f32 %v231, %v92
    %v324 = vmul.f32 %v237, %v92
    %v325 = vmul.f32 %v309, %v94
    %v326 = vmul.f32 %v310, %v94
    %v327 = vmul.f32 %v311, %v94
    %v328 = vmul.f32 %v312, %v94
    %v329 = vmul.f32 %v313, %v94
    %v330 = vmul.f32 %v314, %v94
    %v331 = vmul.f32 %v315, %v94
    %v332 = vmul.f32 %v316, %v94
    %v333 = vadd.f32 %v317, %v325
    %v334 = vadd.f32 %v318, %v326
    %v335 = vadd.f32 %v319, %v327
    %v336 = vadd.f32 %v320, %v328
    %v337 = vadd.f32 %v321, %v329
    %v338 = vadd.f32 %v322, %v330
    %v339 = vadd.f32 %v323, %v331
    %v340 = vadd.f32 %v324, %v332
    %341 = vrot.lane.b32.xlu0 %v210, 56
    %v342 = vpop.permute.xlu0 %341
    %343 = vrot.lane.b32.xlu0 %v223, 56
    %v344 = vpop.permute.xlu0 %343
    %345 = vrot.lane.b32.xlu0 %v229, 56
    %v346 = vpop.permute.xlu0 %345
    %347 = vrot.lane.b32.xlu0 %v235, 56
    %v348 = vpop.permute.xlu0 %347
    %349 = vrot.lane.b32.xlu0 %v216, 56
    %v350 = vpop.permute.xlu0 %349
    %351 = vrot.lane.b32.xlu0 %v225, 56
    %v352 = vpop.permute.xlu0 %351
    %353 = vrot.lane.b32.xlu0 %v231, 56
    %v354 = vpop.permute.xlu0 %353
    %355 = vrot.lane.b32.xlu0 %v237, 56
    %v356 = vpop.permute.xlu0 %355
    %365 = vrot.lane.b32.xlu0 %v210, 72
    %v366 = vpop.permute.xlu0 %365
    %367 = vrot.lane.b32.xlu0 %v223, 72
    %v368 = vpop.permute.xlu0 %367
    %369 = vrot.lane.b32.xlu0 %v229, 72
    %v370 = vpop.permute.xlu0 %369
    %371 = vrot.lane.b32.xlu0 %v235, 72
    %v372 = vpop.permute.xlu0 %371
    %373 = vrot.lane.b32.xlu0 %v216, 72
    %v374 = vpop.permute.xlu0 %373
    %375 = vrot.lane.b32.xlu0 %v225, 72
    %v376 = vpop.permute.xlu0 %375
    %377 = vrot.lane.b32.xlu0 %v231, 72
    %v378 = vpop.permute.xlu0 %377
    %379 = vrot.lane.b32.xlu0 %v237, 72
    %v380 = vpop.permute.xlu0 %379
    %v389 = vsel %vm308, %v342, %v366
    %v390 = vsel %vm308, %v344, %v368
    %v391 = vsel %vm308, %v346, %v370
    %v392 = vsel %vm308, %v348, %v372
    %v393 = vsel %vm308, %v350, %v374
    %v394 = vsel %vm308, %v352, %v376
    %v395 = vsel %vm308, %v354, %v378
    %v396 = vsel %vm308, %v356, %v380
    %398 = vrot.lane.b32.xlu0 %v92, 64
    %v399 = vpop.permute.xlu0 %398
    %v401 = vmul.f32 %v210, %v399
    %v402 = vmul.f32 %v223, %v399
    %v403 = vmul.f32 %v229, %v399
    %v404 = vmul.f32 %v235, %v399
    %v405 = vmul.f32 %v216, %v399
    %v406 = vmul.f32 %v225, %v399
    %v407 = vmul.f32 %v231, %v399
    %v408 = vmul.f32 %v237, %v399
    %v409 = vmul.f32 %v389, %v94
    %v410 = vmul.f32 %v390, %v94
    %v411 = vmul.f32 %v391, %v94
    %v412 = vmul.f32 %v392, %v94
    %v413 = vmul.f32 %v393, %v94
    %v414 = vmul.f32 %v394, %v94
    %v415 = vmul.f32 %v395, %v94
    %v416 = vmul.f32 %v396, %v94
    %425 = vrot.lane.b32.xlu0 %v409, 64
    %v426 = vpop.permute.xlu0 %425
    %427 = vrot.lane.b32.xlu0 %v410, 64
    %v428 = vpop.permute.xlu0 %427
    %429 = vrot.lane.b32.xlu0 %v411, 64
    %v430 = vpop.permute.xlu0 %429
    %431 = vrot.lane.b32.xlu0 %v412, 64
    %v432 = vpop.permute.xlu0 %431
    %433 = vrot.lane.b32.xlu0 %v413, 64
    %v434 = vpop.permute.xlu0 %433
    %435 = vrot.lane.b32.xlu0 %v414, 64
    %v436 = vpop.permute.xlu0 %435
    %437 = vrot.lane.b32.xlu0 %v415, 64
    %v438 = vpop.permute.xlu0 %437
    %439 = vrot.lane.b32.xlu0 %v416, 64
    %v440 = vpop.permute.xlu0 %439
    %v449 = vadd.f32 %v401, %v426
    %v450 = vadd.f32 %v402, %v428
    %v451 = vadd.f32 %v403, %v430
    %v452 = vadd.f32 %v404, %v432
    %v453 = vadd.f32 %v405, %v434
    %v454 = vadd.f32 %v406, %v436
    %v455 = vadd.f32 %v407, %v438
    %v456 = vadd.f32 %v408, %v440
    %458 = vrot.lane.b32.xlu0 %v449, 64
    %v459 = vpop.permute.xlu0 %458
    %vm460 = vcmask 130048
    %v462 = vsel %vm460, %v333, 0
    %v464 = vsel %vm460, %v459, 0
    %466 = vmatprep.subr.mxu0 0.0
    %467 = vmatpush1.xpose.msra.mxu0 0.0
    %468 = vmatprep.subr.mxu0 0.0
    %469 = vmatpush1.xpose.msra.mxu0 0.0
    %470 = vmatprep.subr.mxu0 0.0
    %471 = vmatpush1.xpose.msra.mxu0 0.0
    %472 = vmatprep.subr.mxu0 0.0
    %473 = vmatpush1.xpose.msra.mxu0 0.0
    %474 = vmatprep.subr.mxu0 0.0
    %475 = vmatpush1.xpose.msra.mxu0 0.0
    %476 = vmatprep.subr.mxu0 0.0
    %477 = vmatpush1.xpose.msra.mxu0 0.0
    %478 = vmatprep.subr.mxu0 0.0
    %479 = vmatpush1.xpose.msra.mxu0 0.0
    %480 = vmatprep.subr.mxu0 0.0
    %481 = vmatpush1.xpose.msra.mxu0 0.0
    %482 = vmatprep.subr.mxu0 0.0
    %483 = vmatpush1.xpose.msra.mxu0 0.0
    %484 = vmatprep.subr.mxu0 0.0
    %485 = vmatpush1.xpose.msra.mxu0 0.0
    %486 = vmatprep.subr.mxu0 0.0
    %487 = vmatpush1.xpose.msra.mxu0 0.0
    %488 = vmatprep.subr.mxu0 0.0
    %489 = vmatpush1.xpose.msra.mxu0 0.0
    %490 = vmatprep.subr.mxu0 0.0
    %491 = vmatpush1.xpose.msra.mxu0 0.0
    %492 = vmatprep.subr.mxu0 0.0
    %493 = vmatpush1.xpose.msra.mxu0 0.0
    %494 = vmatprep.subr.mxu0 0.0
    %495 = vmatpush1.xpose.msra.mxu0 0.0
    %496 = vmatprep.subr.mxu0 0.0
    %497 = vmatpush1.xpose.msra.mxu0 %v464
    %498 = vmatprep.subr.mxu0 0.0
    %499 = vmatpush2.xpose.msra.mxu0 0.0
    %500 = vmatprep.subr.mxu0 0.0
    %501 = vmatpush2.xpose.msra.mxu0 0.0
    %502 = vmatprep.subr.mxu0 0.0
    %503 = vmatpush2.xpose.msra.mxu0 0.0
    %504 = vmatprep.subr.mxu0 0.0
    %505 = vmatpush2.xpose.msra.mxu0 0.0
    %506 = vmatprep.subr.mxu0 0.0
    %507 = vmatpush2.xpose.msra.mxu0 0.0
    %508 = vmatprep.subr.mxu0 0.0
    %509 = vmatpush2.xpose.msra.mxu0 0.0
    %510 = vmatprep.subr.mxu0 0.0
    %511 = vmatpush2.xpose.msra.mxu0 0.0
    %512 = vmatprep.subr.mxu0 0.0
    %513 = vmatpush2.xpose.msra.mxu0 0.0
    %514 = vmatprep.subr.mxu0 0.0
    %515 = vmatpush2.xpose.msra.mxu0 0.0
    %516 = vmatprep.subr.mxu0 0.0
    %517 = vmatpush2.xpose.msra.mxu0 0.0
    %518 = vmatprep.subr.mxu0 0.0
    %519 = vmatpush2.xpose.msra.mxu0 0.0
    %520 = vmatprep.subr.mxu0 0.0
    %521 = vmatpush2.xpose.msra.mxu0 0.0
    %522 = vmatprep.subr.mxu0 0.0
    %523 = vmatpush2.xpose.msra.mxu0 0.0
    %524 = vmatprep.subr.mxu0 0.0
    %525 = vmatpush2.xpose.msra.mxu0 0.0
    %526 = vmatprep.subr.mxu0 0.0
    %527 = vmatpush2.xpose.msra.mxu0 0.0
    %528 = vmatprep.subr.mxu0 0.0
    %529 = vmatpush2.xpose.msra.mxu0 0.0
    %530 = vmatprep.mubr.f32.mxu0 0.0
    %531 = vmatmul.mubr.f32.gmra.mxu0 %v462
    %v532 = vpop.f32.mrf.mxu0
    %v533 = vadd.f32 0.0, %v532
    %v534 = vpop.f32.mrf.mxu0
    %535 = vdwg.mxu0
    %537 = vrot.lane.b32.xlu0 %v450, 64
    %v538 = vpop.permute.xlu0 %537
    %v540 = vsel %vm460, %v334, 0
    %v542 = vsel %vm460, %v538, 0
    %544 = vmatprep.subr.mxu0 0.0
    %545 = vmatpush1.xpose.msra.mxu0 0.0
    %546 = vmatprep.subr.mxu0 0.0
    %547 = vmatpush1.xpose.msra.mxu0 0.0
    %548 = vmatprep.subr.mxu0 0.0
    %549 = vmatpush1.xpose.msra.mxu0 0.0
    %550 = vmatprep.subr.mxu0 0.0
    %551 = vmatpush1.xpose.msra.mxu0 0.0
    %552 = vmatprep.subr.mxu0 0.0
    %553 = vmatpush1.xpose.msra.mxu0 0.0
    %554 = vmatprep.subr.mxu0 0.0
    %555 = vmatpush1.xpose.msra.mxu0 0.0
    %556 = vmatprep.subr.mxu0 0.0
    %557 = vmatpush1.xpose.msra.mxu0 0.0
    %558 = vmatprep.subr.mxu0 0.0
    %559 = vmatpush1.xpose.msra.mxu0 0.0
    %560 = vmatprep.subr.mxu0 0.0
    %561 = vmatpush1.xpose.msra.mxu0 0.0
    %562 = vmatprep.subr.mxu0 0.0
    %563 = vmatpush1.xpose.msra.mxu0 0.0
    %564 = vmatprep.subr.mxu0 0.0
    %565 = vmatpush1.xpose.msra.mxu0 0.0
    %566 = vmatprep.subr.mxu0 0.0
    %567 = vmatpush1.xpose.msra.mxu0 0.0
    %568 = vmatprep.subr.mxu0 0.0
    %569 = vmatpush1.xpose.msra.mxu0 0.0
    %570 = vmatprep.subr.mxu0 0.0
    %571 = vmatpush1.xpose.msra.mxu0 0.0
    %572 = vmatprep.subr.mxu0 0.0
    %573 = vmatpush1.xpose.msra.mxu0 0.0
    %574 = vmatprep.subr.mxu0 0.0
    %575 = vmatpush1.xpose.msra.mxu0 %v542
    %576 = vmatprep.subr.mxu0 0.0
    %577 = vmatpush2.xpose.msra.mxu0 0.0
    %578 = vmatprep.subr.mxu0 0.0
    %579 = vmatpush2.xpose.msra.mxu0 0.0
    %580 = vmatprep.subr.mxu0 0.0
    %581 = vmatpush2.xpose.msra.mxu0 0.0
    %582 = vmatprep.subr.mxu0 0.0
    %583 = vmatpush2.xpose.msra.mxu0 0.0
    %584 = vmatprep.subr.mxu0 0.0
    %585 = vmatpush2.xpose.msra.mxu0 0.0
    %586 = vmatprep.subr.mxu0 0.0
    %587 = vmatpush2.xpose.msra.mxu0 0.0
    %588 = vmatprep.subr.mxu0 0.0
    %589 = vmatpush2.xpose.msra.mxu0 0.0
    %590 = vmatprep.subr.mxu0 0.0
    %591 = vmatpush2.xpose.msra.mxu0 0.0
    %592 = vmatprep.subr.mxu0 0.0
    %593 = vmatpush2.xpose.msra.mxu0 0.0
    %594 = vmatprep.subr.mxu0 0.0
    %595 = vmatpush2.xpose.msra.mxu0 0.0
    %596 = vmatprep.subr.mxu0 0.0
    %597 = vmatpush2.xpose.msra.mxu0 0.0
    %598 = vmatprep.subr.mxu0 0.0
    %599 = vmatpush2.xpose.msra.mxu0 0.0
    %600 = vmatprep.subr.mxu0 0.0
    %601 = vmatpush2.xpose.msra.mxu0 0.0
    %602 = vmatprep.subr.mxu0 0.0
    %603 = vmatpush2.xpose.msra.mxu0 0.0
    %604 = vmatprep.subr.mxu0 0.0
    %605 = vmatpush2.xpose.msra.mxu0 0.0
    %606 = vmatprep.subr.mxu0 0.0
    %607 = vmatpush2.xpose.msra.mxu0 0.0
    %608 = vmatprep.mubr.f32.mxu0 0.0
    %609 = vmatmul.mubr.f32.gmra.mxu0 %v540
    %v610 = vpop.f32.mrf.mxu0
    %v611 = vadd.f32 0.0, %v610
    %v612 = vpop.f32.mrf.mxu0
    %613 = vdwg.mxu0
    %615 = vrot.lane.b32.xlu0 %v451, 64
    %v616 = vpop.permute.xlu0 %615
    %v618 = vsel %vm460, %v335, 0
    %v620 = vsel %vm460, %v616, 0
    %622 = vmatprep.subr.mxu0 0.0
    %623 = vmatpush1.xpose.msra.mxu0 0.0
    %624 = vmatprep.subr.mxu0 0.0
    %625 = vmatpush1.xpose.msra.mxu0 0.0
    %626 = vmatprep.subr.mxu0 0.0
    %627 = vmatpush1.xpose.msra.mxu0 0.0
    %628 = vmatprep.subr.mxu0 0.0
    %629 = vmatpush1.xpose.msra.mxu0 0.0
    %630 = vmatprep.subr.mxu0 0.0
    %631 = vmatpush1.xpose.msra.mxu0 0.0
    %632 = vmatprep.subr.mxu0 0.0
    %633 = vmatpush1.xpose.msra.mxu0 0.0
    %634 = vmatprep.subr.mxu0 0.0
    %635 = vmatpush1.xpose.msra.mxu0 0.0
    %636 = vmatprep.subr.mxu0 0.0
    %637 = vmatpush1.xpose.msra.mxu0 0.0
    %638 = vmatprep.subr.mxu0 0.0
    %639 = vmatpush1.xpose.msra.mxu0 0.0
    %640 = vmatprep.subr.mxu0 0.0
    %641 = vmatpush1.xpose.msra.mxu0 0.0
    %642 = vmatprep.subr.mxu0 0.0
    %643 = vmatpush1.xpose.msra.mxu0 0.0
    %644 = vmatprep.subr.mxu0 0.0
    %645 = vmatpush1.xpose.msra.mxu0 0.0
    %646 = vmatprep.subr.mxu0 0.0
    %647 = vmatpush1.xpose.msra.mxu0 0.0
    %648 = vmatprep.subr.mxu0 0.0
    %649 = vmatpush1.xpose.msra.mxu0 0.0
    %650 = vmatprep.subr.mxu0 0.0
    %651 = vmatpush1.xpose.msra.mxu0 0.0
    %652 = vmatprep.subr.mxu0 0.0
    %653 = vmatpush1.xpose.msra.mxu0 %v620
    %654 = vmatprep.subr.mxu0 0.0
    %655 = vmatpush2.xpose.msra.mxu0 0.0
    %656 = vmatprep.subr.mxu0 0.0
    %657 = vmatpush2.xpose.msra.mxu0 0.0
    %658 = vmatprep.subr.mxu0 0.0
    %659 = vmatpush2.xpose.msra.mxu0 0.0
    %660 = vmatprep.subr.mxu0 0.0
    %661 = vmatpush2.xpose.msra.mxu0 0.0
    %662 = vmatprep.subr.mxu0 0.0
    %663 = vmatpush2.xpose.msra.mxu0 0.0
    %664 = vmatprep.subr.mxu0 0.0
    %665 = vmatpush2.xpose.msra.mxu0 0.0
    %666 = vmatprep.subr.mxu0 0.0
    %667 = vmatpush2.xpose.msra.mxu0 0.0
    %668 = vmatprep.subr.mxu0 0.0
    %669 = vmatpush2.xpose.msra.mxu0 0.0
    %670 = vmatprep.subr.mxu0 0.0
    %671 = vmatpush2.xpose.msra.mxu0 0.0
    %672 = vmatprep.subr.mxu0 0.0
    %673 = vmatpush2.xpose.msra.mxu0 0.0
    %674 = vmatprep.subr.mxu0 0.0
    %675 = vmatpush2.xpose.msra.mxu0 0.0
    %676 = vmatprep.subr.mxu0 0.0
    %677 = vmatpush2.xpose.msra.mxu0 0.0
    %678 = vmatprep.subr.mxu0 0.0
    %679 = vmatpush2.xpose.msra.mxu0 0.0
    %680 = vmatprep.subr.mxu0 0.0
    %681 = vmatpush2.xpose.msra.mxu0 0.0
    %682 = vmatprep.subr.mxu0 0.0
    %683 = vmatpush2.xpose.msra.mxu0 0.0
    %684 = vmatprep.subr.mxu0 0.0
    %685 = vmatpush2.xpose.msra.mxu0 0.0
    %686 = vmatprep.mubr.f32.mxu0 0.0
    %687 = vmatmul.mubr.f32.gmra.mxu0 %v618
    %v688 = vpop.f32.mrf.mxu0
    %v689 = vadd.f32 0.0, %v688
    %v690 = vpop.f32.mrf.mxu0
    %691 = vdwg.mxu0
    %693 = vrot.lane.b32.xlu0 %v452, 64
    %v694 = vpop.permute.xlu0 %693
    %v696 = vsel %vm460, %v336, 0
    %v698 = vsel %vm460, %v694, 0
    %700 = vmatprep.subr.mxu0 0.0
    %701 = vmatpush1.xpose.msra.mxu0 0.0
    %702 = vmatprep.subr.mxu0 0.0
    %703 = vmatpush1.xpose.msra.mxu0 0.0
    %704 = vmatprep.subr.mxu0 0.0
    %705 = vmatpush1.xpose.msra.mxu0 0.0
    %706 = vmatprep.subr.mxu0 0.0
    %707 = vmatpush1.xpose.msra.mxu0 0.0
    %708 = vmatprep.subr.mxu0 0.0
    %709 = vmatpush1.xpose.msra.mxu0 0.0
    %710 = vmatprep.subr.mxu0 0.0
    %711 = vmatpush1.xpose.msra.mxu0 0.0
    %712 = vmatprep.subr.mxu0 0.0
    %713 = vmatpush1.xpose.msra.mxu0 0.0
    %714 = vmatprep.subr.mxu0 0.0
    %715 = vmatpush1.xpose.msra.mxu0 0.0
    %716 = vmatprep.subr.mxu0 0.0
    %717 = vmatpush1.xpose.msra.mxu0 0.0
    %718 = vmatprep.subr.mxu0 0.0
    %719 = vmatpush1.xpose.msra.mxu0 0.0
    %720 = vmatprep.subr.mxu0 0.0
    %721 = vmatpush1.xpose.msra.mxu0 0.0
    %722 = vmatprep.subr.mxu0 0.0
    %723 = vmatpush1.xpose.msra.mxu0 0.0
    %724 = vmatprep.subr.mxu0 0.0
    %725 = vmatpush1.xpose.msra.mxu0 0.0
    %726 = vmatprep.subr.mxu0 0.0
    %727 = vmatpush1.xpose.msra.mxu0 0.0
    %728 = vmatprep.subr.mxu0 0.0
    %729 = vmatpush1.xpose.msra.mxu0 0.0
    %730 = vmatprep.subr.mxu0 0.0
    %731 = vmatpush1.xpose.msra.mxu0 %v698
    %732 = vmatprep.subr.mxu0 0.0
    %733 = vmatpush2.xpose.msra.mxu0 0.0
    %734 = vmatprep.subr.mxu0 0.0
    %735 = vmatpush2.xpose.msra.mxu0 0.0
    %736 = vmatprep.subr.mxu0 0.0
    %737 = vmatpush2.xpose.msra.mxu0 0.0
    %738 = vmatprep.subr.mxu0 0.0
    %739 = vmatpush2.xpose.msra.mxu0 0.0
    %740 = vmatprep.subr.mxu0 0.0
    %741 = vmatpush2.xpose.msra.mxu0 0.0
    %742 = vmatprep.subr.mxu0 0.0
    %743 = vmatpush2.xpose.msra.mxu0 0.0
    %744 = vmatprep.subr.mxu0 0.0
    %745 = vmatpush2.xpose.msra.mxu0 0.0
    %746 = vmatprep.subr.mxu0 0.0
    %747 = vmatpush2.xpose.msra.mxu0 0.0
    %748 = vmatprep.subr.mxu0 0.0
    %749 = vmatpush2.xpose.msra.mxu0 0.0
    %750 = vmatprep.subr.mxu0 0.0
    %751 = vmatpush2.xpose.msra.mxu0 0.0
    %752 = vmatprep.subr.mxu0 0.0
    %753 = vmatpush2.xpose.msra.mxu0 0.0
    %754 = vmatprep.subr.mxu0 0.0
    %755 = vmatpush2.xpose.msra.mxu0 0.0
    %756 = vmatprep.subr.mxu0 0.0
    %757 = vmatpush2.xpose.msra.mxu0 0.0
    %758 = vmatprep.subr.mxu0 0.0
    %759 = vmatpush2.xpose.msra.mxu0 0.0
    %760 = vmatprep.subr.mxu0 0.0
    %761 = vmatpush2.xpose.msra.mxu0 0.0
    %762 = vmatprep.subr.mxu0 0.0
    %763 = vmatpush2.xpose.msra.mxu0 0.0
    %764 = vmatprep.mubr.f32.mxu0 0.0
    %765 = vmatmul.mubr.f32.gmra.mxu0 %v696
    %v766 = vpop.f32.mrf.mxu0
    %v767 = vadd.f32 0.0, %v766
    %v768 = vpop.f32.mrf.mxu0
    %769 = vdwg.mxu0
    %771 = vrot.lane.b32.xlu0 %v453, 64
    %v772 = vpop.permute.xlu0 %771
    %v774 = vsel %vm460, %v337, 0
    %v776 = vsel %vm460, %v772, 0
    %778 = vmatprep.subr.mxu0 0.0
    %779 = vmatpush1.xpose.msra.mxu0 0.0
    %780 = vmatprep.subr.mxu0 0.0
    %781 = vmatpush1.xpose.msra.mxu0 0.0
    %782 = vmatprep.subr.mxu0 0.0
    %783 = vmatpush1.xpose.msra.mxu0 0.0
    %784 = vmatprep.subr.mxu0 0.0
    %785 = vmatpush1.xpose.msra.mxu0 0.0
    %786 = vmatprep.subr.mxu0 0.0
    %787 = vmatpush1.xpose.msra.mxu0 0.0
    %788 = vmatprep.subr.mxu0 0.0
    %789 = vmatpush1.xpose.msra.mxu0 0.0
    %790 = vmatprep.subr.mxu0 0.0
    %791 = vmatpush1.xpose.msra.mxu0 0.0
    %792 = vmatprep.subr.mxu0 0.0
    %793 = vmatpush1.xpose.msra.mxu0 0.0
    %794 = vmatprep.subr.mxu0 0.0
    %795 = vmatpush1.xpose.msra.mxu0 0.0
    %796 = vmatprep.subr.mxu0 0.0
    %797 = vmatpush1.xpose.msra.mxu0 0.0
    %798 = vmatprep.subr.mxu0 0.0
    %799 = vmatpush1.xpose.msra.mxu0 0.0
    %800 = vmatprep.subr.mxu0 0.0
    %801 = vmatpush1.xpose.msra.mxu0 0.0
    %802 = vmatprep.subr.mxu0 0.0
    %803 = vmatpush1.xpose.msra.mxu0 0.0
    %804 = vmatprep.subr.mxu0 0.0
    %805 = vmatpush1.xpose.msra.mxu0 0.0
    %806 = vmatprep.subr.mxu0 0.0
    %807 = vmatpush1.xpose.msra.mxu0 0.0
    %808 = vmatprep.subr.mxu0 0.0
    %809 = vmatpush1.xpose.msra.mxu0 %v776
    %810 = vmatprep.subr.mxu0 0.0
    %811 = vmatpush2.xpose.msra.mxu0 0.0
    %812 = vmatprep.subr.mxu0 0.0
    %813 = vmatpush2.xpose.msra.mxu0 0.0
    %814 = vmatprep.subr.mxu0 0.0
    %815 = vmatpush2.xpose.msra.mxu0 0.0
    %816 = vmatprep.subr.mxu0 0.0
    %817 = vmatpush2.xpose.msra.mxu0 0.0
    %818 = vmatprep.subr.mxu0 0.0
    %819 = vmatpush2.xpose.msra.mxu0 0.0
    %820 = vmatprep.subr.mxu0 0.0
    %821 = vmatpush2.xpose.msra.mxu0 0.0
    %822 = vmatprep.subr.mxu0 0.0
    %823 = vmatpush2.xpose.msra.mxu0 0.0
    %824 = vmatprep.subr.mxu0 0.0
    %825 = vmatpush2.xpose.msra.mxu0 0.0
    %826 = vmatprep.subr.mxu0 0.0
    %827 = vmatpush2.xpose.msra.mxu0 0.0
    %828 = vmatprep.subr.mxu0 0.0
    %829 = vmatpush2.xpose.msra.mxu0 0.0
    %830 = vmatprep.subr.mxu0 0.0
    %831 = vmatpush2.xpose.msra.mxu0 0.0
    %832 = vmatprep.subr.mxu0 0.0
    %833 = vmatpush2.xpose.msra.mxu0 0.0
    %834 = vmatprep.subr.mxu0 0.0
    %835 = vmatpush2.xpose.msra.mxu0 0.0
    %836 = vmatprep.subr.mxu0 0.0
    %837 = vmatpush2.xpose.msra.mxu0 0.0
    %838 = vmatprep.subr.mxu0 0.0
    %839 = vmatpush2.xpose.msra.mxu0 0.0
    %840 = vmatprep.subr.mxu0 0.0
    %841 = vmatpush2.xpose.msra.mxu0 0.0
    %842 = vmatprep.mubr.f32.mxu0 0.0
    %843 = vmatmul.mubr.f32.gmra.mxu0 %v774
    %v844 = vpop.f32.mrf.mxu0
    %v845 = vadd.f32 0.0, %v844
    %v846 = vpop.f32.mrf.mxu0
    %847 = vdwg.mxu0
    %849 = vrot.lane.b32.xlu0 %v454, 64
    %v850 = vpop.permute.xlu0 %849
    %v852 = vsel %vm460, %v338, 0
    %v854 = vsel %vm460, %v850, 0
    %856 = vmatprep.subr.mxu0 0.0
    %857 = vmatpush1.xpose.msra.mxu0 0.0
    %858 = vmatprep.subr.mxu0 0.0
    %859 = vmatpush1.xpose.msra.mxu0 0.0
    %860 = vmatprep.subr.mxu0 0.0
    %861 = vmatpush1.xpose.msra.mxu0 0.0
    %862 = vmatprep.subr.mxu0 0.0
    %863 = vmatpush1.xpose.msra.mxu0 0.0
    %864 = vmatprep.subr.mxu0 0.0
    %865 = vmatpush1.xpose.msra.mxu0 0.0
    %866 = vmatprep.subr.mxu0 0.0
    %867 = vmatpush1.xpose.msra.mxu0 0.0
    %868 = vmatprep.subr.mxu0 0.0
    %869 = vmatpush1.xpose.msra.mxu0 0.0
    %870 = vmatprep.subr.mxu0 0.0
    %871 = vmatpush1.xpose.msra.mxu0 0.0
    %872 = vmatprep.subr.mxu0 0.0
    %873 = vmatpush1.xpose.msra.mxu0 0.0
    %874 = vmatprep.subr.mxu0 0.0
    %875 = vmatpush1.xpose.msra.mxu0 0.0
    %876 = vmatprep.subr.mxu0 0.0
    %877 = vmatpush1.xpose.msra.mxu0 0.0
    %878 = vmatprep.subr.mxu0 0.0
    %879 = vmatpush1.xpose.msra.mxu0 0.0
    %880 = vmatprep.subr.mxu0 0.0
    %881 = vmatpush1.xpose.msra.mxu0 0.0
    %882 = vmatprep.subr.mxu0 0.0
    %883 = vmatpush1.xpose.msra.mxu0 0.0
    %884 = vmatprep.subr.mxu0 0.0
    %885 = vmatpush1.xpose.msra.mxu0 0.0
    %886 = vmatprep.subr.mxu0 0.0
    %887 = vmatpush1.xpose.msra.mxu0 %v854
    %888 = vmatprep.subr.mxu0 0.0
    %889 = vmatpush2.xpose.msra.mxu0 0.0
    %890 = vmatprep.subr.mxu0 0.0
    %891 = vmatpush2.xpose.msra.mxu0 0.0
    %892 = vmatprep.subr.mxu0 0.0
    %893 = vmatpush2.xpose.msra.mxu0 0.0
    %894 = vmatprep.subr.mxu0 0.0
    %895 = vmatpush2.xpose.msra.mxu0 0.0
    %896 = vmatprep.subr.mxu0 0.0
    %897 = vmatpush2.xpose.msra.mxu0 0.0
    %898 = vmatprep.subr.mxu0 0.0
    %899 = vmatpush2.xpose.msra.mxu0 0.0
    %900 = vmatprep.subr.mxu0 0.0
    %901 = vmatpush2.xpose.msra.mxu0 0.0
    %902 = vmatprep.subr.mxu0 0.0
    %903 = vmatpush2.xpose.msra.mxu0 0.0
    %904 = vmatprep.subr.mxu0 0.0
    %905 = vmatpush2.xpose.msra.mxu0 0.0
    %906 = vmatprep.subr.mxu0 0.0
    %907 = vmatpush2.xpose.msra.mxu0 0.0
    %908 = vmatprep.subr.mxu0 0.0
    %909 = vmatpush2.xpose.msra.mxu0 0.0
    %910 = vmatprep.subr.mxu0 0.0
    %911 = vmatpush2.xpose.msra.mxu0 0.0
    %912 = vmatprep.subr.mxu0 0.0
    %913 = vmatpush2.xpose.msra.mxu0 0.0
    %914 = vmatprep.subr.mxu0 0.0
    %915 = vmatpush2.xpose.msra.mxu0 0.0
    %916 = vmatprep.subr.mxu0 0.0
    %917 = vmatpush2.xpose.msra.mxu0 0.0
    %918 = vmatprep.subr.mxu0 0.0
    %919 = vmatpush2.xpose.msra.mxu0 0.0
    %920 = vmatprep.mubr.f32.mxu0 0.0
    %921 = vmatmul.mubr.f32.gmra.mxu0 %v852
    %v922 = vpop.f32.mrf.mxu0
    %v923 = vadd.f32 0.0, %v922
    %v924 = vpop.f32.mrf.mxu0
    %925 = vdwg.mxu0
    %927 = vrot.lane.b32.xlu0 %v455, 64
    %v928 = vpop.permute.xlu0 %927
    %v930 = vsel %vm460, %v339, 0
    %v932 = vsel %vm460, %v928, 0
    %934 = vmatprep.subr.mxu0 0.0
    %935 = vmatpush1.xpose.msra.mxu0 0.0
    %936 = vmatprep.subr.mxu0 0.0
    %937 = vmatpush1.xpose.msra.mxu0 0.0
    %938 = vmatprep.subr.mxu0 0.0
    %939 = vmatpush1.xpose.msra.mxu0 0.0
    %940 = vmatprep.subr.mxu0 0.0
    %941 = vmatpush1.xpose.msra.mxu0 0.0
    %942 = vmatprep.subr.mxu0 0.0
    %943 = vmatpush1.xpose.msra.mxu0 0.0
    %944 = vmatprep.subr.mxu0 0.0
    %945 = vmatpush1.xpose.msra.mxu0 0.0
    %946 = vmatprep.subr.mxu0 0.0
    %947 = vmatpush1.xpose.msra.mxu0 0.0
    %948 = vmatprep.subr.mxu0 0.0
    %949 = vmatpush1.xpose.msra.mxu0 0.0
    %950 = vmatprep.subr.mxu0 0.0
    %951 = vmatpush1.xpose.msra.mxu0 0.0
    %952 = vmatprep.subr.mxu0 0.0
    %953 = vmatpush1.xpose.msra.mxu0 0.0
    %954 = vmatprep.subr.mxu0 0.0
    %955 = vmatpush1.xpose.msra.mxu0 0.0
    %956 = vmatprep.subr.mxu0 0.0
    %957 = vmatpush1.xpose.msra.mxu0 0.0
    %958 = vmatprep.subr.mxu0 0.0
    %959 = vmatpush1.xpose.msra.mxu0 0.0
    %960 = vmatprep.subr.mxu0 0.0
    %961 = vmatpush1.xpose.msra.mxu0 0.0
    %962 = vmatprep.subr.mxu0 0.0
    %963 = vmatpush1.xpose.msra.mxu0 0.0
    %964 = vmatprep.subr.mxu0 0.0
    %965 = vmatpush1.xpose.msra.mxu0 %v932
    %966 = vmatprep.subr.mxu0 0.0
    %967 = vmatpush2.xpose.msra.mxu0 0.0
    %968 = vmatprep.subr.mxu0 0.0
    %969 = vmatpush2.xpose.msra.mxu0 0.0
    %970 = vmatprep.subr.mxu0 0.0
    %971 = vmatpush2.xpose.msra.mxu0 0.0
    %972 = vmatprep.subr.mxu0 0.0
    %973 = vmatpush2.xpose.msra.mxu0 0.0
    %974 = vmatprep.subr.mxu0 0.0
    %975 = vmatpush2.xpose.msra.mxu0 0.0
    %976 = vmatprep.subr.mxu0 0.0
    %977 = vmatpush2.xpose.msra.mxu0 0.0
    %978 = vmatprep.subr.mxu0 0.0
    %979 = vmatpush2.xpose.msra.mxu0 0.0
    %980 = vmatprep.subr.mxu0 0.0
    %981 = vmatpush2.xpose.msra.mxu0 0.0
    %982 = vmatprep.subr.mxu0 0.0
    %983 = vmatpush2.xpose.msra.mxu0 0.0
    %984 = vmatprep.subr.mxu0 0.0
    %985 = vmatpush2.xpose.msra.mxu0 0.0
    %986 = vmatprep.subr.mxu0 0.0
    %987 = vmatpush2.xpose.msra.mxu0 0.0
    %988 = vmatprep.subr.mxu0 0.0
    %989 = vmatpush2.xpose.msra.mxu0 0.0
    %990 = vmatprep.subr.mxu0 0.0
    %991 = vmatpush2.xpose.msra.mxu0 0.0
    %992 = vmatprep.subr.mxu0 0.0
    %993 = vmatpush2.xpose.msra.mxu0 0.0
    %994 = vmatprep.subr.mxu0 0.0
    %995 = vmatpush2.xpose.msra.mxu0 0.0
    %996 = vmatprep.subr.mxu0 0.0
    %997 = vmatpush2.xpose.msra.mxu0 0.0
    %998 = vmatprep.mubr.f32.mxu0 0.0
    %999 = vmatmul.mubr.f32.gmra.mxu0 %v930
    %v1000 = vpop.f32.mrf.mxu0
    %v1001 = vadd.f32 0.0, %v1000
    %v1002 = vpop.f32.mrf.mxu0
    %1003 = vdwg.mxu0
    %1005 = vrot.lane.b32.xlu0 %v456, 64
    %v1006 = vpop.permute.xlu0 %1005
    %v1008 = vsel %vm460, %v340, 0
    %v1010 = vsel %vm460, %v1006, 0
    %1012 = vmatprep.subr.mxu0 0.0
    %1013 = vmatpush1.xpose.msra.mxu0 0.0
    %1014 = vmatprep.subr.mxu0 0.0
    %1015 = vmatpush1.xpose.msra.mxu0 0.0
    %1016 = vmatprep.subr.mxu0 0.0
    %1017 = vmatpush1.xpose.msra.mxu0 0.0
    %1018 = vmatprep.subr.mxu0 0.0
    %1019 = vmatpush1.xpose.msra.mxu0 0.0
    %1020 = vmatprep.subr.mxu0 0.0
    %1021 = vmatpush1.xpose.msra.mxu0 0.0
    %1022 = vmatprep.subr.mxu0 0.0
    %1023 = vmatpush1.xpose.msra.mxu0 0.0
    %1024 = vmatprep.subr.mxu0 0.0
    %1025 = vmatpush1.xpose.msra.mxu0 0.0
    %1026 = vmatprep.subr.mxu0 0.0
    %1027 = vmatpush1.xpose.msra.mxu0 0.0
    %1028 = vmatprep.subr.mxu0 0.0
    %1029 = vmatpush1.xpose.msra.mxu0 0.0
    %1030 = vmatprep.subr.mxu0 0.0
    %1031 = vmatpush1.xpose.msra.mxu0 0.0
    %1032 = vmatprep.subr.mxu0 0.0
    %1033 = vmatpush1.xpose.msra.mxu0 0.0
    %1034 = vmatprep.subr.mxu0 0.0
    %1035 = vmatpush1.xpose.msra.mxu0 0.0
    %1036 = vmatprep.subr.mxu0 0.0
    %1037 = vmatpush1.xpose.msra.mxu0 0.0
    %1038 = vmatprep.subr.mxu0 0.0
    %1039 = vmatpush1.xpose.msra.mxu0 0.0
    %1040 = vmatprep.subr.mxu0 0.0
    %1041 = vmatpush1.xpose.msra.mxu0 0.0
    %1042 = vmatprep.subr.mxu0 0.0
    %1043 = vmatpush1.xpose.msra.mxu0 %v1010
    %1044 = vmatprep.subr.mxu0 0.0
    %1045 = vmatpush2.xpose.msra.mxu0 0.0
    %1046 = vmatprep.subr.mxu0 0.0
    %1047 = vmatpush2.xpose.msra.mxu0 0.0
    %1048 = vmatprep.subr.mxu0 0.0
    %1049 = vmatpush2.xpose.msra.mxu0 0.0
    %1050 = vmatprep.subr.mxu0 0.0
    %1051 = vmatpush2.xpose.msra.mxu0 0.0
    %1052 = vmatprep.subr.mxu0 0.0
    %1053 = vmatpush2.xpose.msra.mxu0 0.0
    %1054 = vmatprep.subr.mxu0 0.0
    %1055 = vmatpush2.xpose.msra.mxu0 0.0
    %1056 = vmatprep.subr.mxu0 0.0
    %1057 = vmatpush2.xpose.msra.mxu0 0.0
    %1058 = vmatprep.subr.mxu0 0.0
    %1059 = vmatpush2.xpose.msra.mxu0 0.0
    %1060 = vmatprep.subr.mxu0 0.0
    %1061 = vmatpush2.xpose.msra.mxu0 0.0
    %1062 = vmatprep.subr.mxu0 0.0
    %1063 = vmatpush2.xpose.msra.mxu0 0.0
    %1064 = vmatprep.subr.mxu0 0.0
    %1065 = vmatpush2.xpose.msra.mxu0 0.0
    %1066 = vmatprep.subr.mxu0 0.0
    %1067 = vmatpush2.xpose.msra.mxu0 0.0
    %1068 = vmatprep.subr.mxu0 0.0
    %1069 = vmatpush2.xpose.msra.mxu0 0.0
    %1070 = vmatprep.subr.mxu0 0.0
    %1071 = vmatpush2.xpose.msra.mxu0 0.0
    %1072 = vmatprep.subr.mxu0 0.0
    %1073 = vmatpush2.xpose.msra.mxu0 0.0
    %1074 = vmatprep.subr.mxu0 0.0
    %1075 = vmatpush2.xpose.msra.mxu0 0.0
    %1076 = vmatprep.mubr.f32.mxu0 0.0
    %1077 = vmatmul.mubr.f32.gmra.mxu0 %v1008
    %v1078 = vpop.f32.mrf.mxu0
    %v1079 = vadd.f32 0.0, %v1078
    %v1080 = vpop.f32.mrf.mxu0
    %1081 = vdwg.mxu0
    %v1082 = vadd.f32 %v533, %v90
    %v1083 = vadd.f32 %v611, %v90
    %v1084 = vadd.f32 %v689, %v90
    %v1085 = vadd.f32 %v767, %v90
    %v1086 = vadd.f32 %v845, %v91
    %v1087 = vadd.f32 %v923, %v91
    %v1088 = vadd.f32 %v1001, %v91
    %v1089 = vadd.f32 %v1079, %v91
    %v1090 = vsel %vm308, %v1082, -inf
    %1091 = vmax.xlane.f32.xlu0 %v1090
    %v1092 = vpop.xlane.xlu0 %1091
    %v1093 = vsel %vm308, %v1083, -inf
    %1094 = vmax.xlane.f32.xlu0 %v1093
    %v1095 = vpop.xlane.xlu0 %1094
    %v1096 = vsel %vm308, %v1084, -inf
    %1097 = vmax.xlane.f32.xlu0 %v1096
    %v1098 = vpop.xlane.xlu0 %1097
    %v1099 = vsel %vm308, %v1085, -inf
    %1100 = vmax.xlane.f32.xlu0 %v1099
    %v1101 = vpop.xlane.xlu0 %1100
    %v1102 = vsel %vm308, %v1086, -inf
    %1103 = vmax.xlane.f32.xlu0 %v1102
    %v1104 = vpop.xlane.xlu0 %1103
    %v1105 = vsel %vm308, %v1087, -inf
    %1106 = vmax.xlane.f32.xlu0 %v1105
    %v1107 = vpop.xlane.xlu0 %1106
    %v1108 = vsel %vm308, %v1088, -inf
    %1109 = vmax.xlane.f32.xlu0 %v1108
    %v1110 = vpop.xlane.xlu0 %1109
    %v1111 = vsel %vm308, %v1089, -inf
    %1112 = vmax.xlane.f32.xlu0 %v1111
    %v1113 = vpop.xlane.xlu0 %1112
    %v1114 = vsub.f32 %v1082, %v1092
    %v1115 = vsub.f32 %v1083, %v1095
    %v1116 = vsub.f32 %v1084, %v1098
    %v1117 = vsub.f32 %v1085, %v1101
    %v1118 = vsub.f32 %v1086, %v1104
    %v1119 = vsub.f32 %v1087, %v1107
    %v1120 = vsub.f32 %v1088, %v1110
    %v1121 = vsub.f32 %v1089, %v1113
    %v1122 = vmul.f32 %v1114, 1.442695
    %v1123 = vpow.pop %v1122
    %v1124 = vmul.f32 %v1115, 1.442695
    %v1125 = vpow.pop %v1124
    %v1126 = vmul.f32 %v1116, 1.442695
    %v1127 = vpow.pop %v1126
    %v1128 = vmul.f32 %v1117, 1.442695
    %v1129 = vpow.pop %v1128
    %v1130 = vmul.f32 %v1118, 1.442695
    %v1131 = vpow.pop %v1130
    %v1132 = vmul.f32 %v1119, 1.442695
    %v1133 = vpow.pop %v1132
    %v1134 = vmul.f32 %v1120, 1.442695
    %v1135 = vpow.pop %v1134
    %v1136 = vmul.f32 %v1121, 1.442695
    %v1137 = vpow.pop %v1136
    %v1138 = vsel %vm308, %v1123, 0.0
    %1139 = vadd.xlane.f32.xlu0 %v1138
    %v1140 = vpop.xlane.xlu0 %1139
    %v1141 = vsel %vm308, %v1125, 0.0
    %1142 = vadd.xlane.f32.xlu0 %v1141
    %v1143 = vpop.xlane.xlu0 %1142
    %v1144 = vsel %vm308, %v1127, 0.0
    %1145 = vadd.xlane.f32.xlu0 %v1144
    %v1146 = vpop.xlane.xlu0 %1145
    %v1147 = vsel %vm308, %v1129, 0.0
    %1148 = vadd.xlane.f32.xlu0 %v1147
    %v1149 = vpop.xlane.xlu0 %1148
    %v1150 = vsel %vm308, %v1131, 0.0
    %1151 = vadd.xlane.f32.xlu0 %v1150
    %v1152 = vpop.xlane.xlu0 %1151
    %v1153 = vsel %vm308, %v1133, 0.0
    %1154 = vadd.xlane.f32.xlu0 %v1153
    %v1155 = vpop.xlane.xlu0 %1154
    %v1156 = vsel %vm308, %v1135, 0.0
    %1157 = vadd.xlane.f32.xlu0 %v1156
    %v1158 = vpop.xlane.xlu0 %1157
    %v1159 = vsel %vm308, %v1137, 0.0
    %1160 = vadd.xlane.f32.xlu0 %v1159
    %v1161 = vpop.xlane.xlu0 %1160
    %v1162 = vrcp.pop %v1140
    %v1163 = vrcp.pop %v1143
    %v1164 = vrcp.pop %v1146
    %v1165 = vrcp.pop %v1149
    %v1166 = vrcp.pop %v1152
    %v1167 = vrcp.pop %v1155
    %v1168 = vrcp.pop %v1158
    %v1169 = vrcp.pop %v1161
    %v1170 = vmul.f32 %v1123, %v1162
    %v1171 = vmul.f32 %v1125, %v1163
    %v1172 = vmul.f32 %v1127, %v1164
    %v1173 = vmul.f32 %v1129, %v1165
    %v1174 = vmul.f32 %v1131, %v1166
    %v1175 = vmul.f32 %v1133, %v1167
    %v1176 = vmul.f32 %v1135, %v1168
    %v1177 = vmul.f32 %v1137, %v1169
    %1178 = vst.msk [vmem:[#allocation11] sm:$0xff] %vm308, %v1170
    %1179 = vst.msk [vmem:[#allocation11 + $0x8] sm:$0xff] %vm308, %v1171
    %1180 = vst.msk [vmem:[#allocation11 + $0x10] sm:$0xff] %vm308, %v1172
    %1181 = vst.msk [vmem:[#allocation11 + $0x18] sm:$0xff] %vm308, %v1173
    %1182 = vst.msk [vmem:[#allocation11 + $0x20] sm:$0xff] %vm308, %v1174
    %1183 = vst.msk [vmem:[#allocation11 + $0x28] sm:$0xff] %vm308, %v1175
    %1184 = vst.msk [vmem:[#allocation11 + $0x30] sm:$0xff] %vm308, %v1176
    %1185 = vst.msk [vmem:[#allocation11 + $0x38] sm:$0xff] %vm308, %v1177
    %v1187 = vsel %vm308, %v1170, 0
    %1189 = vmatprep.subr.mxu0 0.0
    %1190 = vmatpush1.msra.mxu0 0.0
    %1191 = vmatprep.subr.mxu0 0.0
    %1192 = vmatpush1.msra.mxu0 0.0
    %1193 = vmatprep.subr.mxu0 0.0
    %1194 = vmatpush1.msra.mxu0 0.0
    %1195 = vmatprep.subr.mxu0 0.0
    %1196 = vmatpush1.msra.mxu0 0.0
    %1197 = vmatprep.subr.mxu0 0.0
    %1198 = vmatpush1.msra.mxu0 0.0
    %1199 = vmatprep.subr.mxu0 0.0
    %1200 = vmatpush1.msra.mxu0 0.0
    %1201 = vmatprep.subr.mxu0 0.0
    %1202 = vmatpush1.msra.mxu0 0.0
    %1203 = vmatprep.subr.mxu0 0.0
    %1204 = vmatpush1.msra.mxu0 0.0
    %1205 = vmatprep.subr.mxu0 0.0
    %1206 = vmatpush1.msra.mxu0 0.0
    %1207 = vmatprep.subr.mxu0 0.0
    %1208 = vmatpush1.msra.mxu0 0.0
    %1209 = vmatprep.subr.mxu0 0.0
    %1210 = vmatpush1.msra.mxu0 0.0
    %1211 = vmatprep.subr.mxu0 0.0
    %1212 = vmatpush1.msra.mxu0 0.0
    %1213 = vmatprep.subr.mxu0 0.0
    %1214 = vmatpush1.msra.mxu0 0.0
    %1215 = vmatprep.subr.mxu0 0.0
    %1216 = vmatpush1.msra.mxu0 0.0
    %1217 = vmatprep.subr.mxu0 0.0
    %1218 = vmatpush1.msra.mxu0 0.0
    %1219 = vmatprep.subr.mxu0 0.0
    %1220 = vmatpush1.msra.mxu0 %v212
    %1221 = vmatprep.subr.mxu0 0.0
    %1222 = vmatpush2.msra.mxu0 0.0
    %1223 = vmatprep.subr.mxu0 0.0
    %1224 = vmatpush2.msra.mxu0 0.0
    %1225 = vmatprep.subr.mxu0 0.0
    %1226 = vmatpush2.msra.mxu0 0.0
    %1227 = vmatprep.subr.mxu0 0.0
    %1228 = vmatpush2.msra.mxu0 0.0
    %1229 = vmatprep.subr.mxu0 0.0
    %1230 = vmatpush2.msra.mxu0 0.0
    %1231 = vmatprep.subr.mxu0 0.0
    %1232 = vmatpush2.msra.mxu0 0.0
    %1233 = vmatprep.subr.mxu0 0.0
    %1234 = vmatpush2.msra.mxu0 0.0
    %1235 = vmatprep.subr.mxu0 0.0
    %1236 = vmatpush2.msra.mxu0 0.0
    %1237 = vmatprep.subr.mxu0 0.0
    %1238 = vmatpush2.msra.mxu0 0.0
    %1239 = vmatprep.subr.mxu0 0.0
    %1240 = vmatpush2.msra.mxu0 0.0
    %1241 = vmatprep.subr.mxu0 0.0
    %1242 = vmatpush2.msra.mxu0 0.0
    %1243 = vmatprep.subr.mxu0 0.0
    %1244 = vmatpush2.msra.mxu0 0.0
    %1245 = vmatprep.subr.mxu0 0.0
    %1246 = vmatpush2.msra.mxu0 0.0
    %1247 = vmatprep.subr.mxu0 0.0
    %1248 = vmatpush2.msra.mxu0 0.0
    %1249 = vmatprep.subr.mxu0 0.0
    %1250 = vmatpush2.msra.mxu0 0.0
    %1251 = vmatprep.subr.mxu0 0.0
    %1252 = vmatpush2.msra.mxu0 0.0
    %1253 = vmatprep.mubr.f32.mxu0 0.0
    %1254 = vmatmul.mubr.f32.gmra.mxu0 %v1187
    %v1255 = vpop.f32.mrf.mxu0
    %v1256 = vadd.f32 0.0, %v1255
    %v1257 = vpop.f32.mrf.mxu0
    %1258 = vdwg.mxu0
    %v1260 = vsel %vm308, %v1171, 0
    %1262 = vmatprep.subr.mxu0 0.0
    %1263 = vmatpush1.msra.mxu0 0.0
    %1264 = vmatprep.subr.mxu0 0.0
    %1265 = vmatpush1.msra.mxu0 0.0
    %1266 = vmatprep.subr.mxu0 0.0
    %1267 = vmatpush1.msra.mxu0 0.0
    %1268 = vmatprep.subr.mxu0 0.0
    %1269 = vmatpush1.msra.mxu0 0.0
    %1270 = vmatprep.subr.mxu0 0.0
    %1271 = vmatpush1.msra.mxu0 0.0
    %1272 = vmatprep.subr.mxu0 0.0
    %1273 = vmatpush1.msra.mxu0 0.0
    %1274 = vmatprep.subr.mxu0 0.0
    %1275 = vmatpush1.msra.mxu0 0.0
    %1276 = vmatprep.subr.mxu0 0.0
    %1277 = vmatpush1.msra.mxu0 0.0
    %1278 = vmatprep.subr.mxu0 0.0
    %1279 = vmatpush1.msra.mxu0 0.0
    %1280 = vmatprep.subr.mxu0 0.0
    %1281 = vmatpush1.msra.mxu0 0.0
    %1282 = vmatprep.subr.mxu0 0.0
    %1283 = vmatpush1.msra.mxu0 0.0
    %1284 = vmatprep.subr.mxu0 0.0
    %1285 = vmatpush1.msra.mxu0 0.0
    %1286 = vmatprep.subr.mxu0 0.0
    %1287 = vmatpush1.msra.mxu0 0.0
    %1288 = vmatprep.subr.mxu0 0.0
    %1289 = vmatpush1.msra.mxu0 0.0
    %1290 = vmatprep.subr.mxu0 0.0
    %1291 = vmatpush1.msra.mxu0 0.0
    %1292 = vmatprep.subr.mxu0 0.0
    %1293 = vmatpush1.msra.mxu0 %v243
    %1294 = vmatprep.subr.mxu0 0.0
    %1295 = vmatpush2.msra.mxu0 0.0
    %1296 = vmatprep.subr.mxu0 0.0
    %1297 = vmatpush2.msra.mxu0 0.0
    %1298 = vmatprep.subr.mxu0 0.0
    %1299 = vmatpush2.msra.mxu0 0.0
    %1300 = vmatprep.subr.mxu0 0.0
    %1301 = vmatpush2.msra.mxu0 0.0
    %1302 = vmatprep.subr.mxu0 0.0
    %1303 = vmatpush2.msra.mxu0 0.0
    %1304 = vmatprep.subr.mxu0 0.0
    %1305 = vmatpush2.msra.mxu0 0.0
    %1306 = vmatprep.subr.mxu0 0.0
    %1307 = vmatpush2.msra.mxu0 0.0
    %1308 = vmatprep.subr.mxu0 0.0
    %1309 = vmatpush2.msra.mxu0 0.0
    %1310 = vmatprep.subr.mxu0 0.0
    %1311 = vmatpush2.msra.mxu0 0.0
    %1312 = vmatprep.subr.mxu0 0.0
    %1313 = vmatpush2.msra.mxu0 0.0
    %1314 = vmatprep.subr.mxu0 0.0
    %1315 = vmatpush2.msra.mxu0 0.0
    %1316 = vmatprep.subr.mxu0 0.0
    %1317 = vmatpush2.msra.mxu0 0.0
    %1318 = vmatprep.subr.mxu0 0.0
    %1319 = vmatpush2.msra.mxu0 0.0
    %1320 = vmatprep.subr.mxu0 0.0
    %1321 = vmatpush2.msra.mxu0 0.0
    %1322 = vmatprep.subr.mxu0 0.0
    %1323 = vmatpush2.msra.mxu0 0.0
    %1324 = vmatprep.subr.mxu0 0.0
    %1325 = vmatpush2.msra.mxu0 0.0
    %1326 = vmatprep.mubr.f32.mxu0 0.0
    %1327 = vmatmul.mubr.f32.gmra.mxu0 %v1260
    %v1328 = vpop.f32.mrf.mxu0
    %v1329 = vadd.f32 0.0, %v1328
    %v1330 = vpop.f32.mrf.mxu0
    %1331 = vdwg.mxu0
    %v1333 = vsel %vm308, %v1172, 0
    %1335 = vmatprep.subr.mxu0 0.0
    %1336 = vmatpush1.msra.mxu0 0.0
    %1337 = vmatprep.subr.mxu0 0.0
    %1338 = vmatpush1.msra.mxu0 0.0
    %1339 = vmatprep.subr.mxu0 0.0
    %1340 = vmatpush1.msra.mxu0 0.0
    %1341 = vmatprep.subr.mxu0 0.0
    %1342 = vmatpush1.msra.mxu0 0.0
    %1343 = vmatprep.subr.mxu0 0.0
    %1344 = vmatpush1.msra.mxu0 0.0
    %1345 = vmatprep.subr.mxu0 0.0
    %1346 = vmatpush1.msra.mxu0 0.0
    %1347 = vmatprep.subr.mxu0 0.0
    %1348 = vmatpush1.msra.mxu0 0.0
    %1349 = vmatprep.subr.mxu0 0.0
    %1350 = vmatpush1.msra.mxu0 0.0
    %1351 = vmatprep.subr.mxu0 0.0
    %1352 = vmatpush1.msra.mxu0 0.0
    %1353 = vmatprep.subr.mxu0 0.0
    %1354 = vmatpush1.msra.mxu0 0.0
    %1355 = vmatprep.subr.mxu0 0.0
    %1356 = vmatpush1.msra.mxu0 0.0
    %1357 = vmatprep.subr.mxu0 0.0
    %1358 = vmatpush1.msra.mxu0 0.0
    %1359 = vmatprep.subr.mxu0 0.0
    %1360 = vmatpush1.msra.mxu0 0.0
    %1361 = vmatprep.subr.mxu0 0.0
    %1362 = vmatpush1.msra.mxu0 0.0
    %1363 = vmatprep.subr.mxu0 0.0
    %1364 = vmatpush1.msra.mxu0 0.0
    %1365 = vmatprep.subr.mxu0 0.0
    %1366 = vmatpush1.msra.mxu0 %v249
    %1367 = vmatprep.subr.mxu0 0.0
    %1368 = vmatpush2.msra.mxu0 0.0
    %1369 = vmatprep.subr.mxu0 0.0
    %1370 = vmatpush2.msra.mxu0 0.0
    %1371 = vmatprep.subr.mxu0 0.0
    %1372 = vmatpush2.msra.mxu0 0.0
    %1373 = vmatprep.subr.mxu0 0.0
    %1374 = vmatpush2.msra.mxu0 0.0
    %1375 = vmatprep.subr.mxu0 0.0
    %1376 = vmatpush2.msra.mxu0 0.0
    %1377 = vmatprep.subr.mxu0 0.0
    %1378 = vmatpush2.msra.mxu0 0.0
    %1379 = vmatprep.subr.mxu0 0.0
    %1380 = vmatpush2.msra.mxu0 0.0
    %1381 = vmatprep.subr.mxu0 0.0
    %1382 = vmatpush2.msra.mxu0 0.0
    %1383 = vmatprep.subr.mxu0 0.0
    %1384 = vmatpush2.msra.mxu0 0.0
    %1385 = vmatprep.subr.mxu0 0.0
    %1386 = vmatpush2.msra.mxu0 0.0
    %1387 = vmatprep.subr.mxu0 0.0
    %1388 = vmatpush2.msra.mxu0 0.0
    %1389 = vmatprep.subr.mxu0 0.0
    %1390 = vmatpush2.msra.mxu0 0.0
    %1391 = vmatprep.subr.mxu0 0.0
    %1392 = vmatpush2.msra.mxu0 0.0
    %1393 = vmatprep.subr.mxu0 0.0
    %1394 = vmatpush2.msra.mxu0 0.0
    %1395 = vmatprep.subr.mxu0 0.0
    %1396 = vmatpush2.msra.mxu0 0.0
    %1397 = vmatprep.subr.mxu0 0.0
    %1398 = vmatpush2.msra.mxu0 0.0
    %1399 = vmatprep.mubr.f32.mxu0 0.0
    %1400 = vmatmul.mubr.f32.gmra.mxu0 %v1333
    %v1401 = vpop.f32.mrf.mxu0
    %v1402 = vadd.f32 0.0, %v1401
    %v1403 = vpop.f32.mrf.mxu0
    %1404 = vdwg.mxu0
    %v1406 = vsel %vm308, %v1173, 0
    %1408 = vmatprep.subr.mxu0 0.0
    %1409 = vmatpush1.msra.mxu0 0.0
    %1410 = vmatprep.subr.mxu0 0.0
    %1411 = vmatpush1.msra.mxu0 0.0
    %1412 = vmatprep.subr.mxu0 0.0
    %1413 = vmatpush1.msra.mxu0 0.0
    %1414 = vmatprep.subr.mxu0 0.0
    %1415 = vmatpush1.msra.mxu0 0.0
    %1416 = vmatprep.subr.mxu0 0.0
    %1417 = vmatpush1.msra.mxu0 0.0
    %1418 = vmatprep.subr.mxu0 0.0
    %1419 = vmatpush1.msra.mxu0 0.0
    %1420 = vmatprep.subr.mxu0 0.0
    %1421 = vmatpush1.msra.mxu0 0.0
    %1422 = vmatprep.subr.mxu0 0.0
    %1423 = vmatpush1.msra.mxu0 0.0
    %1424 = vmatprep.subr.mxu0 0.0
    %1425 = vmatpush1.msra.mxu0 0.0
    %1426 = vmatprep.subr.mxu0 0.0
    %1427 = vmatpush1.msra.mxu0 0.0
    %1428 = vmatprep.subr.mxu0 0.0
    %1429 = vmatpush1.msra.mxu0 0.0
    %1430 = vmatprep.subr.mxu0 0.0
    %1431 = vmatpush1.msra.mxu0 0.0
    %1432 = vmatprep.subr.mxu0 0.0
    %1433 = vmatpush1.msra.mxu0 0.0
    %1434 = vmatprep.subr.mxu0 0.0
    %1435 = vmatpush1.msra.mxu0 0.0
    %1436 = vmatprep.subr.mxu0 0.0
    %1437 = vmatpush1.msra.mxu0 0.0
    %1438 = vmatprep.subr.mxu0 0.0
    %1439 = vmatpush1.msra.mxu0 %v255
    %1440 = vmatprep.subr.mxu0 0.0
    %1441 = vmatpush2.msra.mxu0 0.0
    %1442 = vmatprep.subr.mxu0 0.0
    %1443 = vmatpush2.msra.mxu0 0.0
    %1444 = vmatprep.subr.mxu0 0.0
    %1445 = vmatpush2.msra.mxu0 0.0
    %1446 = vmatprep.subr.mxu0 0.0
    %1447 = vmatpush2.msra.mxu0 0.0
    %1448 = vmatprep.subr.mxu0 0.0
    %1449 = vmatpush2.msra.mxu0 0.0
    %1450 = vmatprep.subr.mxu0 0.0
    %1451 = vmatpush2.msra.mxu0 0.0
    %1452 = vmatprep.subr.mxu0 0.0
    %1453 = vmatpush2.msra.mxu0 0.0
    %1454 = vmatprep.subr.mxu0 0.0
    %1455 = vmatpush2.msra.mxu0 0.0
    %1456 = vmatprep.subr.mxu0 0.0
    %1457 = vmatpush2.msra.mxu0 0.0
    %1458 = vmatprep.subr.mxu0 0.0
    %1459 = vmatpush2.msra.mxu0 0.0
    %1460 = vmatprep.subr.mxu0 0.0
    %1461 = vmatpush2.msra.mxu0 0.0
    %1462 = vmatprep.subr.mxu0 0.0
    %1463 = vmatpush2.msra.mxu0 0.0
    %1464 = vmatprep.subr.mxu0 0.0
    %1465 = vmatpush2.msra.mxu0 0.0
    %1466 = vmatprep.subr.mxu0 0.0
    %1467 = vmatpush2.msra.mxu0 0.0
    %1468 = vmatprep.subr.mxu0 0.0
    %1469 = vmatpush2.msra.mxu0 0.0
    %1470 = vmatprep.subr.mxu0 0.0
    %1471 = vmatpush2.msra.mxu0 0.0
    %1472 = vmatprep.mubr.f32.mxu0 0.0
    %1473 = vmatmul.mubr.f32.gmra.mxu0 %v1406
    %v1474 = vpop.f32.mrf.mxu0
    %v1475 = vadd.f32 0.0, %v1474
    %v1476 = vpop.f32.mrf.mxu0
    %1477 = vdwg.mxu0
    %v1479 = vsel %vm308, %v1174, 0
    %1481 = vmatprep.subr.mxu0 0.0
    %1482 = vmatpush1.msra.mxu0 0.0
    %1483 = vmatprep.subr.mxu0 0.0
    %1484 = vmatpush1.msra.mxu0 0.0
    %1485 = vmatprep.subr.mxu0 0.0
    %1486 = vmatpush1.msra.mxu0 0.0
    %1487 = vmatprep.subr.mxu0 0.0
    %1488 = vmatpush1.msra.mxu0 0.0
    %1489 = vmatprep.subr.mxu0 0.0
    %1490 = vmatpush1.msra.mxu0 0.0
    %1491 = vmatprep.subr.mxu0 0.0
    %1492 = vmatpush1.msra.mxu0 0.0
    %1493 = vmatprep.subr.mxu0 0.0
    %1494 = vmatpush1.msra.mxu0 0.0
    %1495 = vmatprep.subr.mxu0 0.0
    %1496 = vmatpush1.msra.mxu0 0.0
    %1497 = vmatprep.subr.mxu0 0.0
    %1498 = vmatpush1.msra.mxu0 0.0
    %1499 = vmatprep.subr.mxu0 0.0
    %1500 = vmatpush1.msra.mxu0 0.0
    %1501 = vmatprep.subr.mxu0 0.0
    %1502 = vmatpush1.msra.mxu0 0.0
    %1503 = vmatprep.subr.mxu0 0.0
    %1504 = vmatpush1.msra.mxu0 0.0
    %1505 = vmatprep.subr.mxu0 0.0
    %1506 = vmatpush1.msra.mxu0 0.0
    %1507 = vmatprep.subr.mxu0 0.0
    %1508 = vmatpush1.msra.mxu0 0.0
    %1509 = vmatprep.subr.mxu0 0.0
    %1510 = vmatpush1.msra.mxu0 0.0
    %1511 = vmatprep.subr.mxu0 0.0
    %1512 = vmatpush1.msra.mxu0 %v218
    %1513 = vmatprep.subr.mxu0 0.0
    %1514 = vmatpush2.msra.mxu0 0.0
    %1515 = vmatprep.subr.mxu0 0.0
    %1516 = vmatpush2.msra.mxu0 0.0
    %1517 = vmatprep.subr.mxu0 0.0
    %1518 = vmatpush2.msra.mxu0 0.0
    %1519 = vmatprep.subr.mxu0 0.0
    %1520 = vmatpush2.msra.mxu0 0.0
    %1521 = vmatprep.subr.mxu0 0.0
    %1522 = vmatpush2.msra.mxu0 0.0
    %1523 = vmatprep.subr.mxu0 0.0
    %1524 = vmatpush2.msra.mxu0 0.0
    %1525 = vmatprep.subr.mxu0 0.0
    %1526 = vmatpush2.msra.mxu0 0.0
    %1527 = vmatprep.subr.mxu0 0.0
    %1528 = vmatpush2.msra.mxu0 0.0
    %1529 = vmatprep.subr.mxu0 0.0
    %1530 = vmatpush2.msra.mxu0 0.0
    %1531 = vmatprep.subr.mxu0 0.0
    %1532 = vmatpush2.msra.mxu0 0.0
    %1533 = vmatprep.subr.mxu0 0.0
    %1534 = vmatpush2.msra.mxu0 0.0
    %1535 = vmatprep.subr.mxu0 0.0
    %1536 = vmatpush2.msra.mxu0 0.0
    %1537 = vmatprep.subr.mxu0 0.0
    %1538 = vmatpush2.msra.mxu0 0.0
    %1539 = vmatprep.subr.mxu0 0.0
    %1540 = vmatpush2.msra.mxu0 0.0
    %1541 = vmatprep.subr.mxu0 0.0
    %1542 = vmatpush2.msra.mxu0 0.0
    %1543 = vmatprep.subr.mxu0 0.0
    %1544 = vmatpush2.msra.mxu0 0.0
    %1545 = vmatprep.mubr.f32.mxu0 0.0
    %1546 = vmatmul.mubr.f32.gmra.mxu0 %v1479
    %v1547 = vpop.f32.mrf.mxu0
    %v1548 = vadd.f32 0.0, %v1547
    %v1549 = vpop.f32.mrf.mxu0
    %1550 = vdwg.mxu0
    %v1552 = vsel %vm308, %v1175, 0
    %1554 = vmatprep.subr.mxu0 0.0
    %1555 = vmatpush1.msra.mxu0 0.0
    %1556 = vmatprep.subr.mxu0 0.0
    %1557 = vmatpush1.msra.mxu0 0.0
    %1558 = vmatprep.subr.mxu0 0.0
    %1559 = vmatpush1.msra.mxu0 0.0
    %1560 = vmatprep.subr.mxu0 0.0
    %1561 = vmatpush1.msra.mxu0 0.0
    %1562 = vmatprep.subr.mxu0 0.0
    %1563 = vmatpush1.msra.mxu0 0.0
    %1564 = vmatprep.subr.mxu0 0.0
    %1565 = vmatpush1.msra.mxu0 0.0
    %1566 = vmatprep.subr.mxu0 0.0
    %1567 = vmatpush1.msra.mxu0 0.0
    %1568 = vmatprep.subr.mxu0 0.0
    %1569 = vmatpush1.msra.mxu0 0.0
    %1570 = vmatprep.subr.mxu0 0.0
    %1571 = vmatpush1.msra.mxu0 0.0
    %1572 = vmatprep.subr.mxu0 0.0
    %1573 = vmatpush1.msra.mxu0 0.0
    %1574 = vmatprep.subr.mxu0 0.0
    %1575 = vmatpush1.msra.mxu0 0.0
    %1576 = vmatprep.subr.mxu0 0.0
    %1577 = vmatpush1.msra.mxu0 0.0
    %1578 = vmatprep.subr.mxu0 0.0
    %1579 = vmatpush1.msra.mxu0 0.0
    %1580 = vmatprep.subr.mxu0 0.0
    %1581 = vmatpush1.msra.mxu0 0.0
    %1582 = vmatprep.subr.mxu0 0.0
    %1583 = vmatpush1.msra.mxu0 0.0
    %1584 = vmatprep.subr.mxu0 0.0
    %1585 = vmatpush1.msra.mxu0 %v245
    %1586 = vmatprep.subr.mxu0 0.0
    %1587 = vmatpush2.msra.mxu0 0.0
    %1588 = vmatprep.subr.mxu0 0.0
    %1589 = vmatpush2.msra.mxu0 0.0
    %1590 = vmatprep.subr.mxu0 0.0
    %1591 = vmatpush2.msra.mxu0 0.0
    %1592 = vmatprep.subr.mxu0 0.0
    %1593 = vmatpush2.msra.mxu0 0.0
    %1594 = vmatprep.subr.mxu0 0.0
    %1595 = vmatpush2.msra.mxu0 0.0
    %1596 = vmatprep.subr.mxu0 0.0
    %1597 = vmatpush2.msra.mxu0 0.0
    %1598 = vmatprep.subr.mxu0 0.0
    %1599 = vmatpush2.msra.mxu0 0.0
    %1600 = vmatprep.subr.mxu0 0.0
    %1601 = vmatpush2.msra.mxu0 0.0
    %1602 = vmatprep.subr.mxu0 0.0
    %1603 = vmatpush2.msra.mxu0 0.0
    %1604 = vmatprep.subr.mxu0 0.0
    %1605 = vmatpush2.msra.mxu0 0.0
    %1606 = vmatprep.subr.mxu0 0.0
    %1607 = vmatpush2.msra.mxu0 0.0
    %1608 = vmatprep.subr.mxu0 0.0
    %1609 = vmatpush2.msra.mxu0 0.0
    %1610 = vmatprep.subr.mxu0 0.0
    %1611 = vmatpush2.msra.mxu0 0.0
    %1612 = vmatprep.subr.mxu0 0.0
    %1613 = vmatpush2.msra.mxu0 0.0
    %1614 = vmatprep.subr.mxu0 0.0
    %1615 = vmatpush2.msra.mxu0 0.0
    %1616 = vmatprep.subr.mxu0 0.0
    %1617 = vmatpush2.msra.mxu0 0.0
    %1618 = vmatprep.mubr.f32.mxu0 0.0
    %1619 = vmatmul.mubr.f32.gmra.mxu0 %v1552
    %v1620 = vpop.f32.mrf.mxu0
    %v1621 = vadd.f32 0.0, %v1620
    %v1622 = vpop.f32.mrf.mxu0
    %1623 = vdwg.mxu0
    %v1625 = vsel %vm308, %v1176, 0
    %1627 = vmatprep.subr.mxu0 0.0
    %1628 = vmatpush1.msra.mxu0 0.0
    %1629 = vmatprep.subr.mxu0 0.0
    %1630 = vmatpush1.msra.mxu0 0.0
    %1631 = vmatprep.subr.mxu0 0.0
    %1632 = vmatpush1.msra.mxu0 0.0
    %1633 = vmatprep.subr.mxu0 0.0
    %1634 = vmatpush1.msra.mxu0 0.0
    %1635 = vmatprep.subr.mxu0 0.0
    %1636 = vmatpush1.msra.mxu0 0.0
    %1637 = vmatprep.subr.mxu0 0.0
    %1638 = vmatpush1.msra.mxu0 0.0
    %1639 = vmatprep.subr.mxu0 0.0
    %1640 = vmatpush1.msra.mxu0 0.0
    %1641 = vmatprep.subr.mxu0 0.0
    %1642 = vmatpush1.msra.mxu0 0.0
    %1643 = vmatprep.subr.mxu0 0.0
    %1644 = vmatpush1.msra.mxu0 0.0
    %1645 = vmatprep.subr.mxu0 0.0
    %1646 = vmatpush1.msra.mxu0 0.0
    %1647 = vmatprep.subr.mxu0 0.0
    %1648 = vmatpush1.msra.mxu0 0.0
    %1649 = vmatprep.subr.mxu0 0.0
    %1650 = vmatpush1.msra.mxu0 0.0
    %1651 = vmatprep.subr.mxu0 0.0
    %1652 = vmatpush1.msra.mxu0 0.0
    %1653 = vmatprep.subr.mxu0 0.0
    %1654 = vmatpush1.msra.mxu0 0.0
    %1655 = vmatprep.subr.mxu0 0.0
    %1656 = vmatpush1.msra.mxu0 0.0
    %1657 = vmatprep.subr.mxu0 0.0
    %1658 = vmatpush1.msra.mxu0 %v251
    %1659 = vmatprep.subr.mxu0 0.0
    %1660 = vmatpush2.msra.mxu0 0.0
    %1661 = vmatprep.subr.mxu0 0.0
    %1662 = vmatpush2.msra.mxu0 0.0
    %1663 = vmatprep.subr.mxu0 0.0
    %1664 = vmatpush2.msra.mxu0 0.0
    %1665 = vmatprep.subr.mxu0 0.0
    %1666 = vmatpush2.msra.mxu0 0.0
    %1667 = vmatprep.subr.mxu0 0.0
    %1668 = vmatpush2.msra.mxu0 0.0
    %1669 = vmatprep.subr.mxu0 0.0
    %1670 = vmatpush2.msra.mxu0 0.0
    %1671 = vmatprep.subr.mxu0 0.0
    %1672 = vmatpush2.msra.mxu0 0.0
    %1673 = vmatprep.subr.mxu0 0.0
    %1674 = vmatpush2.msra.mxu0 0.0
    %1675 = vmatprep.subr.mxu0 0.0
    %1676 = vmatpush2.msra.mxu0 0.0
    %1677 = vmatprep.subr.mxu0 0.0
    %1678 = vmatpush2.msra.mxu0 0.0
    %1679 = vmatprep.subr.mxu0 0.0
    %1680 = vmatpush2.msra.mxu0 0.0
    %1681 = vmatprep.subr.mxu0 0.0
    %1682 = vmatpush2.msra.mxu0 0.0
    %1683 = vmatprep.subr.mxu0 0.0
    %1684 = vmatpush2.msra.mxu0 0.0
    %1685 = vmatprep.subr.mxu0 0.0
    %1686 = vmatpush2.msra.mxu0 0.0
    %1687 = vmatprep.subr.mxu0 0.0
    %1688 = vmatpush2.msra.mxu0 0.0
    %1689 = vmatprep.subr.mxu0 0.0
    %1690 = vmatpush2.msra.mxu0 0.0
    %1691 = vmatprep.mubr.f32.mxu0 0.0
    %1692 = vmatmul.mubr.f32.gmra.mxu0 %v1625
    %v1693 = vpop.f32.mrf.mxu0
    %v1694 = vadd.f32 0.0, %v1693
    %v1695 = vpop.f32.mrf.mxu0
    %1696 = vdwg.mxu0
    %v1698 = vsel %vm308, %v1177, 0
    %1700 = vmatprep.subr.mxu0 0.0
    %1701 = vmatpush1.msra.mxu0 0.0
    %1702 = vmatprep.subr.mxu0 0.0
    %1703 = vmatpush1.msra.mxu0 0.0
    %1704 = vmatprep.subr.mxu0 0.0
    %1705 = vmatpush1.msra.mxu0 0.0
    %1706 = vmatprep.subr.mxu0 0.0
    %1707 = vmatpush1.msra.mxu0 0.0
    %1708 = vmatprep.subr.mxu0 0.0
    %1709 = vmatpush1.msra.mxu0 0.0
    %1710 = vmatprep.subr.mxu0 0.0
    %1711 = vmatpush1.msra.mxu0 0.0
    %1712 = vmatprep.subr.mxu0 0.0
    %1713 = vmatpush1.msra.mxu0 0.0
    %1714 = vmatprep.subr.mxu0 0.0
    %1715 = vmatpush1.msra.mxu0 0.0
    %1716 = vmatprep.subr.mxu0 0.0
    %1717 = vmatpush1.msra.mxu0 0.0
    %1718 = vmatprep.subr.mxu0 0.0
    %1719 = vmatpush1.msra.mxu0 0.0
    %1720 = vmatprep.subr.mxu0 0.0
    %1721 = vmatpush1.msra.mxu0 0.0
    %1722 = vmatprep.subr.mxu0 0.0
    %1723 = vmatpush1.msra.mxu0 0.0
    %1724 = vmatprep.subr.mxu0 0.0
    %1725 = vmatpush1.msra.mxu0 0.0
    %1726 = vmatprep.subr.mxu0 0.0
    %1727 = vmatpush1.msra.mxu0 0.0
    %1728 = vmatprep.subr.mxu0 0.0
    %1729 = vmatpush1.msra.mxu0 0.0
    %1730 = vmatprep.subr.mxu0 0.0
    %1731 = vmatpush1.msra.mxu0 %v257
    %1732 = vmatprep.subr.mxu0 0.0
    %1733 = vmatpush2.msra.mxu0 0.0
    %1734 = vmatprep.subr.mxu0 0.0
    %1735 = vmatpush2.msra.mxu0 0.0
    %1736 = vmatprep.subr.mxu0 0.0
    %1737 = vmatpush2.msra.mxu0 0.0
    %1738 = vmatprep.subr.mxu0 0.0
    %1739 = vmatpush2.msra.mxu0 0.0
    %1740 = vmatprep.subr.mxu0 0.0
    %1741 = vmatpush2.msra.mxu0 0.0
    %1742 = vmatprep.subr.mxu0 0.0
    %1743 = vmatpush2.msra.mxu0 0.0
    %1744 = vmatprep.subr.mxu0 0.0
    %1745 = vmatpush2.msra.mxu0 0.0
    %1746 = vmatprep.subr.mxu0 0.0
    %1747 = vmatpush2.msra.mxu0 0.0
    %1748 = vmatprep.subr.mxu0 0.0
    %1749 = vmatpush2.msra.mxu0 0.0
    %1750 = vmatprep.subr.mxu0 0.0
    %1751 = vmatpush2.msra.mxu0 0.0
    %1752 = vmatprep.subr.mxu0 0.0
    %1753 = vmatpush2.msra.mxu0 0.0
    %1754 = vmatprep.subr.mxu0 0.0
    %1755 = vmatpush2.msra.mxu0 0.0
    %1756 = vmatprep.subr.mxu0 0.0
    %1757 = vmatpush2.msra.mxu0 0.0
    %1758 = vmatprep.subr.mxu0 0.0
    %1759 = vmatpush2.msra.mxu0 0.0
    %1760 = vmatprep.subr.mxu0 0.0
    %1761 = vmatpush2.msra.mxu0 0.0
    %1762 = vmatprep.subr.mxu0 0.0
    %1763 = vmatpush2.msra.mxu0 0.0
    %1764 = vmatprep.mubr.f32.mxu0 0.0
    %1765 = vmatmul.mubr.f32.gmra.mxu0 %v1698
    %v1766 = vpop.f32.mrf.mxu0
    %v1767 = vadd.f32 0.0, %v1766
    %v1768 = vpop.f32.mrf.mxu0
    %1769 = vdwg.mxu0
    %v1770 = vld [vmem:[%s5] sm:$0xff]
    %v1771 = vld [vmem:[%s5 + $0x8] sm:$0xff]
    %v1772 = vld [vmem:[%s5 + $0x10] sm:$0xff]
    %v1773 = vld [vmem:[%s5 + $0x18] sm:$0xff]
    %v1774 = vld [vmem:[%s5 + $0x20] sm:$0xff]
    %v1775 = vld [vmem:[%s5 + $0x28] sm:$0xff]
    %v1776 = vld [vmem:[%s5 + $0x30] sm:$0xff]
    %v1777 = vld [vmem:[%s5 + $0x38] sm:$0xff]
    %v1779 = vsel %vm460, %v1329, 0
    %v1782 = vsel %vm460, %v1621, 0
    %1784 = vmatprep.subr.mxu0 0.0
    %1785 = vmatpush1.msra.mxu0 0.0
    %1786 = vmatprep.subr.mxu0 0.0
    %1787 = vmatpush1.msra.mxu0 0.0
    %1788 = vmatprep.subr.mxu0 0.0
    %1789 = vmatpush1.msra.mxu0 0.0
    %1790 = vmatprep.subr.mxu0 0.0
    %1791 = vmatpush1.msra.mxu0 0.0
    %1792 = vmatprep.subr.mxu0 0.0
    %1793 = vmatpush1.msra.mxu0 0.0
    %1794 = vmatprep.subr.mxu0 0.0
    %1795 = vmatpush1.msra.mxu0 0.0
    %1796 = vmatprep.subr.mxu0 0.0
    %1797 = vmatpush1.msra.mxu0 0.0
    %1798 = vmatprep.subr.mxu0 0.0
    %1799 = vmatpush1.msra.mxu0 0.0
    %1800 = vmatprep.subr.mxu0 0.0
    %1801 = vmatpush1.msra.mxu0 0.0
    %1802 = vmatprep.subr.mxu0 0.0
    %1803 = vmatpush1.msra.mxu0 0.0
    %1804 = vmatprep.subr.mxu0 0.0
    %1805 = vmatpush1.msra.mxu0 0.0
    %1806 = vmatprep.subr.mxu0 0.0
    %1807 = vmatpush1.msra.mxu0 0.0
    %1808 = vmatprep.subr.mxu0 0.0
    %1809 = vmatpush1.msra.mxu0 0.0
    %1810 = vmatprep.subr.mxu0 0.0
    %1811 = vmatpush1.msra.mxu0 0.0
    %1812 = vmatprep.subr.mxu0 0.0
    %1813 = vmatpush1.msra.mxu0 %v1773
    %1814 = vmatprep.subr.mxu0 0.0
    %1815 = vmatpush1.msra.mxu0 %v1772
    %1816 = vmatprep.subr.mxu0 0.0
    %1817 = vmatpush2.msra.mxu0 0.0
    %1818 = vmatprep.subr.mxu0 0.0
    %1819 = vmatpush2.msra.mxu0 0.0
    %1820 = vmatprep.subr.mxu0 0.0
    %1821 = vmatpush2.msra.mxu0 0.0
    %1822 = vmatprep.subr.mxu0 0.0
    %1823 = vmatpush2.msra.mxu0 0.0
    %1824 = vmatprep.subr.mxu0 0.0
    %1825 = vmatpush2.msra.mxu0 0.0
    %1826 = vmatprep.subr.mxu0 0.0
    %1827 = vmatpush2.msra.mxu0 0.0
    %1828 = vmatprep.subr.mxu0 0.0
    %1829 = vmatpush2.msra.mxu0 0.0
    %1830 = vmatprep.subr.mxu0 0.0
    %1831 = vmatpush2.msra.mxu0 0.0
    %1832 = vmatprep.subr.mxu0 0.0
    %1833 = vmatpush2.msra.mxu0 0.0
    %1834 = vmatprep.subr.mxu0 0.0
    %1835 = vmatpush2.msra.mxu0 0.0
    %1836 = vmatprep.subr.mxu0 0.0
    %1837 = vmatpush2.msra.mxu0 0.0
    %1838 = vmatprep.subr.mxu0 0.0
    %1839 = vmatpush2.msra.mxu0 0.0
    %1840 = vmatprep.subr.mxu0 0.0
    %1841 = vmatpush2.msra.mxu0 0.0
    %1842 = vmatprep.subr.mxu0 0.0
    %1843 = vmatpush2.msra.mxu0 0.0
    %1844 = vmatprep.subr.mxu0 0.0
    %1845 = vmatpush2.msra.mxu0 0.0
    %1846 = vmatprep.subr.mxu0 0.0
    %1847 = vmatpush2.msra.mxu0 0.0
    %1848 = vmatprep.mubr.f32.mxu0 0.0
    %1849 = vmatmul.mubr.f32.gmra.mxu0 %v1779
    %v1850 = vpop.f32.mrf.mxu0
    %v1851 = vadd.f32 0.0, %v1850
    %v1852 = vpop.f32.mrf.mxu0
    %1853 = vmatprep.mubr.f32.mxu0 0.0
    %1854 = vmatmul.mubr.f32.gmra.mxu0 %v1782
    %v1855 = vpop.f32.mrf.mxu0
    %v1856 = vadd.f32 0.0, %v1855
    %v1857 = vpop.f32.mrf.mxu0
    %1858 = vdwg.mxu0
    %v1860 = vsel %vm460, %v1256, 0
    %v1863 = vsel %vm460, %v1548, 0
    %1865 = vmatprep.subr.mxu0 0.0
    %1866 = vmatpush1.msra.mxu0 0.0
    %1867 = vmatprep.subr.mxu0 0.0
    %1868 = vmatpush1.msra.mxu0 0.0
    %1869 = vmatprep.subr.mxu0 0.0
    %1870 = vmatpush1.msra.mxu0 0.0
    %1871 = vmatprep.subr.mxu0 0.0
    %1872 = vmatpush1.msra.mxu0 0.0
    %1873 = vmatprep.subr.mxu0 0.0
    %1874 = vmatpush1.msra.mxu0 0.0
    %1875 = vmatprep.subr.mxu0 0.0
    %1876 = vmatpush1.msra.mxu0 0.0
    %1877 = vmatprep.subr.mxu0 0.0
    %1878 = vmatpush1.msra.mxu0 0.0
    %1879 = vmatprep.subr.mxu0 0.0
    %1880 = vmatpush1.msra.mxu0 0.0
    %1881 = vmatprep.subr.mxu0 0.0
    %1882 = vmatpush1.msra.mxu0 0.0
    %1883 = vmatprep.subr.mxu0 0.0
    %1884 = vmatpush1.msra.mxu0 0.0
    %1885 = vmatprep.subr.mxu0 0.0
    %1886 = vmatpush1.msra.mxu0 0.0
    %1887 = vmatprep.subr.mxu0 0.0
    %1888 = vmatpush1.msra.mxu0 0.0
    %1889 = vmatprep.subr.mxu0 0.0
    %1890 = vmatpush1.msra.mxu0 0.0
    %1891 = vmatprep.subr.mxu0 0.0
    %1892 = vmatpush1.msra.mxu0 0.0
    %1893 = vmatprep.subr.mxu0 0.0
    %1894 = vmatpush1.msra.mxu0 %v1771
    %1895 = vmatprep.subr.mxu0 0.0
    %1896 = vmatpush1.msra.mxu0 %v1770
    %1897 = vmatprep.subr.mxu0 0.0
    %1898 = vmatpush2.msra.mxu0 0.0
    %1899 = vmatprep.subr.mxu0 0.0
    %1900 = vmatpush2.msra.mxu0 0.0
    %1901 = vmatprep.subr.mxu0 0.0
    %1902 = vmatpush2.msra.mxu0 0.0
    %1903 = vmatprep.subr.mxu0 0.0
    %1904 = vmatpush2.msra.mxu0 0.0
    %1905 = vmatprep.subr.mxu0 0.0
    %1906 = vmatpush2.msra.mxu0 0.0
    %1907 = vmatprep.subr.mxu0 0.0
    %1908 = vmatpush2.msra.mxu0 0.0
    %1909 = vmatprep.subr.mxu0 0.0
    %1910 = vmatpush2.msra.mxu0 0.0
    %1911 = vmatprep.subr.mxu0 0.0
    %1912 = vmatpush2.msra.mxu0 0.0
    %1913 = vmatprep.subr.mxu0 0.0
    %1914 = vmatpush2.msra.mxu0 0.0
    %1915 = vmatprep.subr.mxu0 0.0
    %1916 = vmatpush2.msra.mxu0 0.0
    %1917 = vmatprep.subr.mxu0 0.0
    %1918 = vmatpush2.msra.mxu0 0.0
    %1919 = vmatprep.subr.mxu0 0.0
    %1920 = vmatpush2.msra.mxu0 0.0
    %1921 = vmatprep.subr.mxu0 0.0
    %1922 = vmatpush2.msra.mxu0 0.0
    %1923 = vmatprep.subr.mxu0 0.0
    %1924 = vmatpush2.msra.mxu0 0.0
    %1925 = vmatprep.subr.mxu0 0.0
    %1926 = vmatpush2.msra.mxu0 0.0
    %1927 = vmatprep.subr.mxu0 0.0
    %1928 = vmatpush2.msra.mxu0 0.0
    %1929 = vmatprep.mubr.f32.mxu0 0.0
    %1930 = vmatmul.mubr.f32.gmra.mxu0 %v1860
    %v1931 = vpop.f32.mrf.mxu0
    %v1932 = vadd.f32 %v1851, %v1931
    %v1933 = vpop.f32.mrf.mxu0
    %1934 = vmatprep.mubr.f32.mxu0 0.0
    %1935 = vmatmul.mubr.f32.gmra.mxu0 %v1863
    %v1936 = vpop.f32.mrf.mxu0
    %v1937 = vadd.f32 %v1856, %v1936
    %v1938 = vpop.f32.mrf.mxu0
    %1939 = vdwg.mxu0
    %v1941 = vsel %vm460, %v1402, 0
    %v1944 = vsel %vm460, %v1694, 0
    %1946 = vmatprep.subr.mxu0 0.0
    %1947 = vmatpush1.msra.mxu0 0.0
    %1948 = vmatprep.subr.mxu0 0.0
    %1949 = vmatpush1.msra.mxu0 0.0
    %1950 = vmatprep.subr.mxu0 0.0
    %1951 = vmatpush1.msra.mxu0 0.0
    %1952 = vmatprep.subr.mxu0 0.0
    %1953 = vmatpush1.msra.mxu0 0.0
    %1954 = vmatprep.subr.mxu0 0.0
    %1955 = vmatpush1.msra.mxu0 0.0
    %1956 = vmatprep.subr.mxu0 0.0
    %1957 = vmatpush1.msra.mxu0 0.0
    %1958 = vmatprep.subr.mxu0 0.0
    %1959 = vmatpush1.msra.mxu0 0.0
    %1960 = vmatprep.subr.mxu0 0.0
    %1961 = vmatpush1.msra.mxu0 0.0
    %1962 = vmatprep.subr.mxu0 0.0
    %1963 = vmatpush1.msra.mxu0 0.0
    %1964 = vmatprep.subr.mxu0 0.0
    %1965 = vmatpush1.msra.mxu0 0.0
    %1966 = vmatprep.subr.mxu0 0.0
    %1967 = vmatpush1.msra.mxu0 0.0
    %1968 = vmatprep.subr.mxu0 0.0
    %1969 = vmatpush1.msra.mxu0 0.0
    %1970 = vmatprep.subr.mxu0 0.0
    %1971 = vmatpush1.msra.mxu0 0.0
    %1972 = vmatprep.subr.mxu0 0.0
    %1973 = vmatpush1.msra.mxu0 0.0
    %1974 = vmatprep.subr.mxu0 0.0
    %1975 = vmatpush1.msra.mxu0 %v1775
    %1976 = vmatprep.subr.mxu0 0.0
    %1977 = vmatpush1.msra.mxu0 %v1774
    %1978 = vmatprep.subr.mxu0 0.0
    %1979 = vmatpush2.msra.mxu0 0.0
    %1980 = vmatprep.subr.mxu0 0.0
    %1981 = vmatpush2.msra.mxu0 0.0
    %1982 = vmatprep.subr.mxu0 0.0
    %1983 = vmatpush2.msra.mxu0 0.0
    %1984 = vmatprep.subr.mxu0 0.0
    %1985 = vmatpush2.msra.mxu0 0.0
    %1986 = vmatprep.subr.mxu0 0.0
    %1987 = vmatpush2.msra.mxu0 0.0
    %1988 = vmatprep.subr.mxu0 0.0
    %1989 = vmatpush2.msra.mxu0 0.0
    %1990 = vmatprep.subr.mxu0 0.0
    %1991 = vmatpush2.msra.mxu0 0.0
    %1992 = vmatprep.subr.mxu0 0.0
    %1993 = vmatpush2.msra.mxu0 0.0
    %1994 = vmatprep.subr.mxu0 0.0
    %1995 = vmatpush2.msra.mxu0 0.0
    %1996 = vmatprep.subr.mxu0 0.0
    %1997 = vmatpush2.msra.mxu0 0.0
    %1998 = vmatprep.subr.mxu0 0.0
    %1999 = vmatpush2.msra.mxu0 0.0
    %2000 = vmatprep.subr.mxu0 0.0
    %2001 = vmatpush2.msra.mxu0 0.0
    %2002 = vmatprep.subr.mxu0 0.0
    %2003 = vmatpush2.msra.mxu0 0.0
    %2004 = vmatprep.subr.mxu0 0.0
    %2005 = vmatpush2.msra.mxu0 0.0
    %2006 = vmatprep.subr.mxu0 0.0
    %2007 = vmatpush2.msra.mxu0 0.0
    %2008 = vmatprep.subr.mxu0 0.0
    %2009 = vmatpush2.msra.mxu0 0.0
    %2010 = vmatprep.mubr.f32.mxu0 0.0
    %2011 = vmatmul.mubr.f32.gmra.mxu0 %v1941
    %v2012 = vpop.f32.mrf.mxu0
    %v2013 = vadd.f32 0.0, %v2012
    %v2014 = vpop.f32.mrf.mxu0
    %2015 = vmatprep.mubr.f32.mxu0 0.0
    %2016 = vmatmul.mubr.f32.gmra.mxu0 %v1944
    %v2017 = vpop.f32.mrf.mxu0
    %v2018 = vadd.f32 0.0, %v2017
    %v2019 = vpop.f32.mrf.mxu0
    %2020 = vdwg.mxu0
    %v2021 = vadd.f32 %v1932, %v2013
    %v2022 = vadd.f32 %v1937, %v2018
    %v2024 = vsel %vm460, %v1475, 0
    %v2027 = vsel %vm460, %v1767, 0
    %2029 = vmatprep.subr.mxu0 0.0
    %2030 = vmatpush1.msra.mxu0 0.0
    %2031 = vmatprep.subr.mxu0 0.0
    %2032 = vmatpush1.msra.mxu0 0.0
    %2033 = vmatprep.subr.mxu0 0.0
    %2034 = vmatpush1.msra.mxu0 0.0
    %2035 = vmatprep.subr.mxu0 0.0
    %2036 = vmatpush1.msra.mxu0 0.0
    %2037 = vmatprep.subr.mxu0 0.0
    %2038 = vmatpush1.msra.mxu0 0.0
    %2039 = vmatprep.subr.mxu0 0.0
    %2040 = vmatpush1.msra.mxu0 0.0
    %2041 = vmatprep.subr.mxu0 0.0
    %2042 = vmatpush1.msra.mxu0 0.0
    %2043 = vmatprep.subr.mxu0 0.0
    %2044 = vmatpush1.msra.mxu0 0.0
    %2045 = vmatprep.subr.mxu0 0.0
    %2046 = vmatpush1.msra.mxu0 0.0
    %2047 = vmatprep.subr.mxu0 0.0
    %2048 = vmatpush1.msra.mxu0 0.0
    %2049 = vmatprep.subr.mxu0 0.0
    %2050 = vmatpush1.msra.mxu0 0.0
    %2051 = vmatprep.subr.mxu0 0.0
    %2052 = vmatpush1.msra.mxu0 0.0
    %2053 = vmatprep.subr.mxu0 0.0
    %2054 = vmatpush1.msra.mxu0 0.0
    %2055 = vmatprep.subr.mxu0 0.0
    %2056 = vmatpush1.msra.mxu0 0.0
    %2057 = vmatprep.subr.mxu0 0.0
    %2058 = vmatpush1.msra.mxu0 %v1777
    %2059 = vmatprep.subr.mxu0 0.0
    %2060 = vmatpush1.msra.mxu0 %v1776
    %2061 = vmatprep.subr.mxu0 0.0
    %2062 = vmatpush2.msra.mxu0 0.0
    %2063 = vmatprep.subr.mxu0 0.0
    %2064 = vmatpush2.msra.mxu0 0.0
    %2065 = vmatprep.subr.mxu0 0.0
    %2066 = vmatpush2.msra.mxu0 0.0
    %2067 = vmatprep.subr.mxu0 0.0
    %2068 = vmatpush2.msra.mxu0 0.0
    %2069 = vmatprep.subr.mxu0 0.0
    %2070 = vmatpush2.msra.mxu0 0.0
    %2071 = vmatprep.subr.mxu0 0.0
    %2072 = vmatpush2.msra.mxu0 0.0
    %2073 = vmatprep.subr.mxu0 0.0
    %2074 = vmatpush2.msra.mxu0 0.0
    %2075 = vmatprep.subr.mxu0 0.0
    %2076 = vmatpush2.msra.mxu0 0.0
    %2077 = vmatprep.subr.mxu0 0.0
    %2078 = vmatpush2.msra.mxu0 0.0
    %2079 = vmatprep.subr.mxu0 0.0
    %2080 = vmatpush2.msra.mxu0 0.0
    %2081 = vmatprep.subr.mxu0 0.0
    %2082 = vmatpush2.msra.mxu0 0.0
    %2083 = vmatprep.subr.mxu0 0.0
    %2084 = vmatpush2.msra.mxu0 0.0
    %2085 = vmatprep.subr.mxu0 0.0
    %2086 = vmatpush2.msra.mxu0 0.0
    %2087 = vmatprep.subr.mxu0 0.0
    %2088 = vmatpush2.msra.mxu0 0.0
    %2089 = vmatprep.subr.mxu0 0.0
    %2090 = vmatpush2.msra.mxu0 0.0
    %2091 = vmatprep.subr.mxu0 0.0
    %2092 = vmatpush2.msra.mxu0 0.0
    %2093 = vmatprep.mubr.f32.mxu0 0.0
    %2094 = vmatmul.mubr.f32.gmra.mxu0 %v2024
    %v2095 = vpop.f32.mrf.mxu0
    %v2096 = vadd.f32 0.0, %v2095
    %v2097 = vpop.f32.mrf.mxu0
    %2098 = vmatprep.mubr.f32.mxu0 0.0
    %2099 = vmatmul.mubr.f32.gmra.mxu0 %v2027
    %v2100 = vpop.f32.mrf.mxu0
    %v2101 = vadd.f32 0.0, %v2100
    %v2102 = vpop.f32.mrf.mxu0
    %2103 = vdwg.mxu0
    %v2104 = vadd.f32 %v2021, %v2096
    %v2105 = vadd.f32 %v2022, %v2101
    %v2106 = vadd.f32 %v88, %v2104
    %v2107 = vadd.f32 %v89, %v2105
    %v2108 = vmul.f32 %v2106, %v2106
    %v2109 = vmul.f32 %v2107, %v2107
    %v2110 = vsel %vm99, %v2108, 0.0
    %2111 = vadd.xlane.f32.xlu0 %v2110
    %v2112 = vpop.xlane.xlu0 %2111
    %v2113 = vsel %vm99, %v2109, 0.0
    %2114 = vadd.xlane.f32.xlu0 %v2113
    %v2115 = vpop.xlane.xlu0 %2114
    %v2116 = vmul.f32 %v2112, %v106
    %v2117 = vmul.f32 %v2115, %v106
    %v2118 = vadd.f32 %v2116, 1e-05
    %v2119 = vadd.f32 %v2117, 1e-05
    %v2120 = vrsqrt.pop %v2118
    %v2121 = vrsqrt.pop %v2119
    %v2122 = vmul.f32 %v2106, %v2120
    %v2123 = vmul.f32 %v2107, %v2121
    %v2124 = vlaneseq
    %v2125 = vshrl.u32 %v2124, 7
    %v2126 = vsub.s32 0, %v2125
    %v2127 = vrot.slane %v96, %v2126
    %v2128 = vmul.f32 %v2122, %v2127
    %v2129 = vmul.f32 %v2123, %v2127
    %v2130 = vld [vmem:[#allocation8] sm:$0xff]
    %v2131 = vld [vmem:[#allocation8 + $0x8] sm:$0xff]
    %v2132 = vld [vmem:[#allocation8 + $0x10] sm:$0xff]
    %v2133 = vld [vmem:[#allocation8 + $0x18] sm:$0xff]
    %v2134 = vld [vmem:[#allocation8 + $0x20] sm:$0xff]
    %v2135 = vld [vmem:[#allocation8 + $0x28] sm:$0xff]
    %v2136 = vld [vmem:[#allocation8 + $0x30] sm:$0xff]
    %v2137 = vld [vmem:[#allocation8 + $0x38] sm:$0xff]
    %v2138 = vld [vmem:[#allocation8 + $0x40] sm:$0xff]
    %v2139 = vld [vmem:[#allocation8 + $0x48] sm:$0xff]
    %v2140 = vld [vmem:[#allocation8 + $0x50] sm:$0xff]
    %v2141 = vld [vmem:[#allocation8 + $0x58] sm:$0xff]
    %v2142 = vld [vmem:[#allocation8 + $0x60] sm:$0xff]
    %v2143 = vld [vmem:[#allocation8 + $0x68] sm:$0xff]
    %v2144 = vld [vmem:[#allocation8 + $0x70] sm:$0xff]
    %v2145 = vld [vmem:[#allocation8 + $0x78] sm:$0xff]
    %v2147 = vsel %vm99, %v2128, 0
    %v2150 = vsel %vm99, %v2129, 0
    %2152 = vmatprep.subr.mxu0 0.0
    %2153 = vmatpush1.msra.mxu0 0.0
    %2154 = vmatprep.subr.mxu0 0.0
    %2155 = vmatpush1.msra.mxu0 0.0
    %2156 = vmatprep.subr.mxu0 0.0
    %2157 = vmatpush1.msra.mxu0 0.0
    %2158 = vmatprep.subr.mxu0 0.0
    %2159 = vmatpush1.msra.mxu0 0.0
    %2160 = vmatprep.subr.mxu0 0.0
    %2161 = vmatpush1.msra.mxu0 0.0
    %2162 = vmatprep.subr.mxu0 0.0
    %2163 = vmatpush1.msra.mxu0 0.0
    %2164 = vmatprep.subr.mxu0 0.0
    %2165 = vmatpush1.msra.mxu0 0.0
    %2166 = vmatprep.subr.mxu0 0.0
    %2167 = vmatpush1.msra.mxu0 0.0
    %2168 = vmatprep.subr.mxu0 %v2145
    %2169 = vmatpush1.msra.mxu0 %v2144
    %2170 = vmatprep.subr.mxu0 %v2143
    %2171 = vmatpush1.msra.mxu0 %v2142
    %2172 = vmatprep.subr.mxu0 %v2141
    %2173 = vmatpush1.msra.mxu0 %v2140
    %2174 = vmatprep.subr.mxu0 %v2139
    %2175 = vmatpush1.msra.mxu0 %v2138
    %2176 = vmatprep.subr.mxu0 %v2137
    %2177 = vmatpush1.msra.mxu0 %v2136
    %2178 = vmatprep.subr.mxu0 %v2135
    %2179 = vmatpush1.msra.mxu0 %v2134
    %2180 = vmatprep.subr.mxu0 %v2133
    %2181 = vmatpush1.msra.mxu0 %v2132
    %2182 = vmatprep.subr.mxu0 %v2131
    %2183 = vmatpush1.msra.mxu0 %v2130
    %2184 = vmatprep.subr.mxu0 0.0
    %2185 = vmatpush2.msra.mxu0 0.0
    %2186 = vmatprep.subr.mxu0 0.0
    %2187 = vmatpush2.msra.mxu0 0.0
    %2188 = vmatprep.subr.mxu0 0.0
    %2189 = vmatpush2.msra.mxu0 0.0
    %2190 = vmatprep.subr.mxu0 0.0
    %2191 = vmatpush2.msra.mxu0 0.0
    %2192 = vmatprep.subr.mxu0 0.0
    %2193 = vmatpush2.msra.mxu0 0.0
    %2194 = vmatprep.subr.mxu0 0.0
    %2195 = vmatpush2.msra.mxu0 0.0
    %2196 = vmatprep.subr.mxu0 0.0
    %2197 = vmatpush2.msra.mxu0 0.0
    %2198 = vmatprep.subr.mxu0 0.0
    %2199 = vmatpush2.msra.mxu0 0.0
    %2200 = vmatprep.subr.mxu0 0.0
    %2201 = vmatpush2.msra.mxu0 0.0
    %2202 = vmatprep.subr.mxu0 0.0
    %2203 = vmatpush2.msra.mxu0 0.0
    %2204 = vmatprep.subr.mxu0 0.0
    %2205 = vmatpush2.msra.mxu0 0.0
    %2206 = vmatprep.subr.mxu0 0.0
    %2207 = vmatpush2.msra.mxu0 0.0
    %2208 = vmatprep.subr.mxu0 0.0
    %2209 = vmatpush2.msra.mxu0 0.0
    %2210 = vmatprep.subr.mxu0 0.0
    %2211 = vmatpush2.msra.mxu0 0.0
    %2212 = vmatprep.subr.mxu0 0.0
    %2213 = vmatpush2.msra.mxu0 0.0
    %2214 = vmatprep.subr.mxu0 0.0
    %2215 = vmatpush2.msra.mxu0 0.0
    %2216 = vmatprep.mubr.f32.mxu0 0.0
    %2217 = vmatmul.mubr.f32.gmra.mxu0 %v2147
    %v2218 = vpop.f32.mrf.mxu0
    %v2219 = vadd.f32 0.0, %v2218
    %v2220 = vpop.f32.mrf.mxu0
    %v2221 = vadd.f32 0.0, %v2220
    %2222 = vmatprep.mubr.f32.mxu0 0.0
    %2223 = vmatmul.mubr.f32.gmra.mxu0 %v2150
    %v2224 = vpop.f32.mrf.mxu0
    %v2225 = vadd.f32 0.0, %v2224
    %v2226 = vpop.f32.mrf.mxu0
    %v2227 = vadd.f32 0.0, %v2226
    %2228 = vdwg.mxu0
    %v2229 = vxor.u32 %v2219, 2147483648
    %v2230 = vxor.u32 %v2225, 2147483648
    %v2231 = vmul.f32 %v2229, 1.442695
    %v2232 = vpow.pop %v2231
    %v2233 = vmul.f32 %v2230, 1.442695
    %v2234 = vpow.pop %v2233
    %v2235 = vadd.f32 %v2232, 1.0
    %v2236 = vadd.f32 %v2234, 1.0
    %v2237 = vrcp.pop %v2235
    %v2238 = vmul.f32 1.0, %v2237
    %v2239 = vrcp.pop %v2236
    %v2240 = vmul.f32 1.0, %v2239
    %v2241 = vmul.f32 %v2219, %v2238
    %v2242 = vmul.f32 %v2225, %v2240
    %v2243 = vmul.f32 %v2241, %v2221
    %v2244 = vmul.f32 %v2242, %v2227
    %v2245 = vld [vmem:[%s7] sm:$0xff]
    %v2246 = vld [vmem:[%s7 + $0x8] sm:$0xff]
    %v2247 = vld [vmem:[%s7 + $0x10] sm:$0xff]
    %v2248 = vld [vmem:[%s7 + $0x18] sm:$0xff]
    %v2249 = vld [vmem:[%s7 + $0x20] sm:$0xff]
    %v2250 = vld [vmem:[%s7 + $0x28] sm:$0xff]
    %v2251 = vld [vmem:[%s7 + $0x30] sm:$0xff]
    %v2252 = vld [vmem:[%s7 + $0x38] sm:$0xff]
    %v2253 = vld [vmem:[%s7 + $0x40] sm:$0xff]
    %v2254 = vld [vmem:[%s7 + $0x48] sm:$0xff]
    %v2255 = vld [vmem:[%s7 + $0x50] sm:$0xff]
    %v2256 = vld [vmem:[%s7 + $0x58] sm:$0xff]
    %v2257 = vld [vmem:[%s7 + $0x60] sm:$0xff]
    %v2258 = vld [vmem:[%s7 + $0x68] sm:$0xff]
    %v2259 = vld [vmem:[%s7 + $0x70] sm:$0xff]
    %v2260 = vld [vmem:[%s7 + $0x78] sm:$0xff]
    %2261 = vmatprep.subr.mxu0 0.0
    %2262 = vmatpush1.msra.mxu0 %v2260
    %2263 = vmatprep.subr.mxu0 0.0
    %2264 = vmatpush1.msra.mxu0 %v2259
    %2265 = vmatprep.subr.mxu0 0.0
    %2266 = vmatpush1.msra.mxu0 %v2258
    %2267 = vmatprep.subr.mxu0 0.0
    %2268 = vmatpush1.msra.mxu0 %v2257
    %2269 = vmatprep.subr.mxu0 0.0
    %2270 = vmatpush1.msra.mxu0 %v2256
    %2271 = vmatprep.subr.mxu0 0.0
    %2272 = vmatpush1.msra.mxu0 %v2255
    %2273 = vmatprep.subr.mxu0 0.0
    %2274 = vmatpush1.msra.mxu0 %v2254
    %2275 = vmatprep.subr.mxu0 0.0
    %2276 = vmatpush1.msra.mxu0 %v2253
    %2277 = vmatprep.subr.mxu0 0.0
    %2278 = vmatpush1.msra.mxu0 %v2252
    %2279 = vmatprep.subr.mxu0 0.0
    %2280 = vmatpush1.msra.mxu0 %v2251
    %2281 = vmatprep.subr.mxu0 0.0
    %2282 = vmatpush1.msra.mxu0 %v2250
    %2283 = vmatprep.subr.mxu0 0.0
    %2284 = vmatpush1.msra.mxu0 %v2249
    %2285 = vmatprep.subr.mxu0 0.0
    %2286 = vmatpush1.msra.mxu0 %v2248
    %2287 = vmatprep.subr.mxu0 0.0
    %2288 = vmatpush1.msra.mxu0 %v2247
    %2289 = vmatprep.subr.mxu0 0.0
    %2290 = vmatpush1.msra.mxu0 %v2246
    %2291 = vmatprep.subr.mxu0 0.0
    %2292 = vmatpush1.msra.mxu0 %v2245
    %2293 = vmatprep.subr.mxu0 0.0
    %2294 = vmatpush2.msra.mxu0 0.0
    %2295 = vmatprep.subr.mxu0 0.0
    %2296 = vmatpush2.msra.mxu0 0.0
    %2297 = vmatprep.subr.mxu0 0.0
    %2298 = vmatpush2.msra.mxu0 0.0
    %2299 = vmatprep.subr.mxu0 0.0
    %2300 = vmatpush2.msra.mxu0 0.0
    %2301 = vmatprep.subr.mxu0 0.0
    %2302 = vmatpush2.msra.mxu0 0.0
    %2303 = vmatprep.subr.mxu0 0.0
    %2304 = vmatpush2.msra.mxu0 0.0
    %2305 = vmatprep.subr.mxu0 0.0
    %2306 = vmatpush2.msra.mxu0 0.0
    %2307 = vmatprep.subr.mxu0 0.0
    %2308 = vmatpush2.msra.mxu0 0.0
    %2309 = vmatprep.subr.mxu0 0.0
    %2310 = vmatpush2.msra.mxu0 0.0
    %2311 = vmatprep.subr.mxu0 0.0
    %2312 = vmatpush2.msra.mxu0 0.0
    %2313 = vmatprep.subr.mxu0 0.0
    %2314 = vmatpush2.msra.mxu0 0.0
    %2315 = vmatprep.subr.mxu0 0.0
    %2316 = vmatpush2.msra.mxu0 0.0
    %2317 = vmatprep.subr.mxu0 0.0
    %2318 = vmatpush2.msra.mxu0 0.0
    %2319 = vmatprep.subr.mxu0 0.0
    %2320 = vmatpush2.msra.mxu0 0.0
    %2321 = vmatprep.subr.mxu0 0.0
    %2322 = vmatpush2.msra.mxu0 0.0
    %2323 = vmatprep.subr.mxu0 0.0
    %2324 = vmatpush2.msra.mxu0 0.0
    %2325 = vmatprep.mubr.f32.mxu0 0.0
    %2326 = vmatmul.mubr.f32.gmra.mxu0 %v2243
    %v2327 = vpop.f32.mrf.mxu0
    %v2328 = vadd.f32 0.0, %v2327
    %v2329 = vpop.f32.mrf.mxu0
    %2330 = vmatprep.mubr.f32.mxu0 0.0
    %2331 = vmatmul.mubr.f32.gmra.mxu0 %v2244
    %v2332 = vpop.f32.mrf.mxu0
    %v2333 = vadd.f32 0.0, %v2332
    %v2334 = vpop.f32.mrf.mxu0
    %2335 = vdwg.mxu0
    %v2336 = vadd.f32 %v2106, %v2328
    %v2337 = vadd.f32 %v2107, %v2333
    %2338 = vst.msk [vmem:[#allocation10] sm:$0xff] %vm99, %v2336
    %2339 = vst.msk [vmem:[#allocation10 + $0x8] sm:$0xff] %vm99, %v2337
    // Predicated region
    $region50: #{tpu_custom_call.1} parent=1 // pred_check
      _
    $region51: #{tpu_custom_call.1} parent=1 // pred_check_branch
      %2341 = sbr.rel (0) target = $region53
    $region52: #{tpu_custom_call.1} parent=1 // pred_region
      %s2343 = ssub.s32 256, 256
      %2344 = vsyncadd [#allocation4], %s2343
      %s2345 = sshll.u32 [#allocation10], 4
      %s2346 = int_to_ptr.vmem [resolvable:$true] %s2345
      %2351 = dma.vmem_to_hbm [thread:$0]  %s2346, 256, %s8, [#allocation4], 128, 128, 8
    $region53: #{tpu_custom_call.1} parent=1 // pred_fallthru
      _
    // Predicated region
    $region54: #{tpu_custom_call.1} parent=1 // pred_check
      _
    $region55: #{tpu_custom_call.1} parent=1 // pred_check_branch
      %2353 = sbr.rel (0) target = $region57
    $region56: #{tpu_custom_call.1} parent=1 // pred_region
      %s2355 = ssub.s32 1024, 1024
      %2356 = vsyncadd [#allocation12], %s2355
      %s2357 = sshll.u32 [#allocation11], 4
      %s2358 = int_to_ptr.vmem [resolvable:$true] %s2357
      %2363 = dma.vmem_to_hbm [thread:$0]  %s2358, 1024, %s9, [#allocation12], 128, 128, 8
    $region57: #{tpu_custom_call.1} parent=1 // pred_fallthru
      _
    // Predicated region
    $region58: #{tpu_custom_call.1} parent=1 // pred_check
      _
    $region59: #{tpu_custom_call.1} parent=1 // pred_check_branch
      %2365 = sbr.rel (0) target = $region61
    $region60: #{tpu_custom_call.1} parent=1 // pred_region
      %2366 = dma.done [#allocation4], 256
    $region61: #{tpu_custom_call.1} parent=1 // pred_fallthru
      _
    // Predicated region
    $region62: #{tpu_custom_call.1} parent=1 // pred_check
      _
    $region63: #{tpu_custom_call.1} parent=1 // pred_check_branch
      %2368 = sbr.rel (0) target = $region65
    $region64: #{tpu_custom_call.1} parent=1 // pred_region
      %2369 = dma.done [#allocation12], 1024
    $region65: #{tpu_custom_call.1} parent=1 // pred_fallthru
      _
    %2370 = vsyncpa [#allocation3], 1
    %2371 = vsyncpa [#allocation6], 1
    %2372 = vsyncpa [#allocation9], 1
    %2373 = vsyncpa [#allocation4], 1
    %2374 = vsyncpa [#allocation12], 1

</llo_original>
